<compile_context>
chip_gen: v7x
topology: tpu7x:2x2x1
jax: 0.10.0
libtpu: 0.0.40
codegen_flags: <defaults>
</compile_context>

<pallas_src>
import functools

import jax
import jax.numpy as jnp
from jax import lax
from jax.experimental import pallas as pl
from jax.experimental.pallas import tpu as pltpu


def _round_up(a, m):
    return ((a + m - 1) // m) * m


def _double_conv_kernel(x_ref, w1_ref, c1_ref, w2_ref, wid_ref, cf_ref,
                        o_ref, xpad_ref, ypad_ref, *,
                        W, L, P0, Cin, Cout, Lpad):
    """Fused DoubleConv for one image in channel-major flat-pixel layout.

    x_ref   : (Cin,  L)      flat image, pixels on the lane axis (L = H*W)
    w1_ref  : (9, Cout, Cin) conv1 weights (BN1 folded), tap-major
    c1_ref  : (Cout, 1)      conv1 bias   (BN1 folded)
    w2_ref  : (9, Cout, Cout) conv2 weights (BN2 folded), tap-major
    wid_ref : (Cout, Cin)    identity 1x1 weights (BNid folded)
    cf_ref  : (Cout, 1)      combined conv2 + identity bias
    o_ref   : (Cout, L)      lane-dense output (reshapes to NCHW for free)
    xpad_ref: (Cin,  Lpad)   VMEM scratch: zero-padded flat input
    ypad_ref: (Cout, Lpad)   VMEM scratch: zero-padded flat intermediate
    """
    f32 = jnp.float32

    # Column masks (computed in-kernel from an iota; nothing shipped from HBM).
    # For a left-shifted tap (kw=0) any value sitting in the LAST image column
    # would wrap into the next row's first output column -> zero it; for a
    # right-shifted tap (kw=2) zero values in the FIRST image column.
    lane = lax.broadcasted_iota(jnp.int32, (1, Lpad), 1)
    col = (lane + ((-P0) % W)) % W                 # image column of each lane
    keep_not_last = col != (W - 1)                 # used by kw == 0 taps
    keep_not_first = col != 0                      # used by kw == 2 taps

    # ---- stage-1 input: zero-padded, lane-dense buffer in VMEM --------------
    xpad_ref[:, :P0] = jnp.zeros((Cin, P0), f32)
    xpad_ref[:, P0 + L:] = jnp.zeros((Cin, Lpad - P0 - L), f32)
    x = x_ref[...]
    xpad_ref[:, P0:P0 + L] = x
    xp = xpad_ref[...]
    x_srcs = (jnp.where(keep_not_last, xp, 0.0),   # kw = 0
              xp,                                  # kw = 1
              jnp.where(keep_not_first, xp, 0.0))  # kw = 2

    # ---- stage 1: conv3x3 (+BN1) + ReLU, accumulated per tap (no im2col) ----
    acc = None
    for kh in range(3):
        for kw in range(3):
            off = P0 + (kh - 1) * W + (kw - 1)
            p = jnp.dot(w1_ref[kh * 3 + kw], x_srcs[kw][:, off:off + L],
                        preferred_element_type=f32)
            acc = p if acc is None else acc + p
    y1 = jnp.maximum(acc + c1_ref[...], 0.0)       # (Cout, L) f32

    # ---- zero-padded intermediate in VMEM scratch ----------------------------
    ypad_ref[:, :P0] = jnp.zeros((Cout, P0), f32)
    ypad_ref[:, P0 + L:] = jnp.zeros((Cout, Lpad - P0 - L), f32)
    ypad_ref[:, P0:P0 + L] = y1
    yp = ypad_ref[...]
    y_srcs = (jnp.where(keep_not_last, yp, 0.0),
              yp,
              jnp.where(keep_not_first, yp, 0.0))

    # ---- stage 2: conv3x3 (+BN2) + identity 1x1 (+BNid) + add + ReLU --------
    # The identity branch is just one more matmul into the same accumulator.
    acc2 = jnp.dot(wid_ref[...], x, preferred_element_type=f32)
    for kh in range(3):
        for kw in range(3):
            off = P0 + (kh - 1) * W + (kw - 1)
            acc2 = acc2 + jnp.dot(w2_ref[kh * 3 + kw],
                                  y_srcs[kw][:, off:off + L],
                                  preferred_element_type=f32)
    o_ref[...] = jnp.maximum(acc2 + cf_ref[...], 0.0).astype(o_ref.dtype)


def double_conv_forward(x_nchw,
                        w1, b1, g1, beta1, m1, v1,
                        w2, b2, g2, beta2, m2, v2,
                        wi, bi, gi, betai, mi, vi,
                        *, eps=1e-5):
    """Forward of DoubleConv(in_channels, out_channels) for NCHW float32 input."""
    N, Cin, H, W = x_nchw.shape
    Cout = w1.shape[0]
    L = H * W

    # ---- fold inference-mode BatchNorm into the convolutions (plain JAX) -----
    s1 = g1 / jnp.sqrt(v1 + eps)
    s2 = g2 / jnp.sqrt(v2 + eps)
    si = gi / jnp.sqrt(vi + eps)
    w1k = (w1 * s1[:, None, None, None]).transpose(2, 3, 0, 1)
    w1k = w1k.reshape(9, Cout, Cin)                               # tap-major
    c1 = ((b1 - m1) * s1 + beta1).reshape(Cout, 1)
    w2k = (w2 * s2[:, None, None, None]).transpose(2, 3, 0, 1)
    w2k = w2k.reshape(9, Cout, Cout)
    widm = wi[:, :, 0, 0] * si[:, None]                           # (Cout, Cin)
    cf = ((b2 - m2) * s2 + beta2 + (bi - mi) * si + betai).reshape(Cout, 1)

    # ---- free layout change: NCHW -> (N, C, H*W); all padding done in VMEM ---
    xf = x_nchw.reshape(N, Cin, L)

    P0 = _round_up(W + 1, 128)                    # lane-aligned front apron
    Lpad = _round_up(P0 + L + W + 1, 128)         # padded flat-pixel length

    kernel = functools.partial(_double_conv_kernel, W=W, L=L, P0=P0,
                               Cin=Cin, Cout=Cout, Lpad=Lpad)

    out_flat = pl.pallas_call(
        kernel,
        out_shape=jax.ShapeDtypeStruct((N, Cout, L), x_nchw.dtype),
        grid_spec=pltpu.PrefetchScalarGridSpec(
            num_scalar_prefetch=0,
            grid=(N,),
            in_specs=[
                pl.BlockSpec((None, Cin, L), lambda n: (n, 0, 0)),
                pl.BlockSpec((9, Cout, Cin), lambda n: (0, 0, 0)),
                pl.BlockSpec((Cout, 1), lambda n: (0, 0)),
                pl.BlockSpec((9, Cout, Cout), lambda n: (0, 0, 0)),
                pl.BlockSpec((Cout, Cin), lambda n: (0, 0)),
                pl.BlockSpec((Cout, 1), lambda n: (0, 0)),
            ],
            out_specs=pl.BlockSpec((None, Cout, L), lambda n: (n, 0, 0)),
            scratch_shapes=[
                pltpu.VMEM((Cin, Lpad), jnp.float32),
                pltpu.VMEM((Cout, Lpad), jnp.float32),
            ],
        ),
        compiler_params=pltpu.CompilerParams(
            dimension_semantics=("parallel",),
            vmem_limit_bytes=48 * 1024 * 1024,    # safe on v7x (64 MiB phys)
        ),
    )(xf, w1k, c1, w2k, widm, cf)

    # (N, Cout, H*W) -> NCHW is a free reshape (no HBM repack pass).
    return out_flat.reshape(N, Cout, H, W)


def _reference(x, w1, b1, g1, beta1, m1, v1, w2, b2, g2, beta2, m2, v2,
               wi, bi, gi, betai, mi, vi, eps=1e-5):
    def conv(x_, w_, b_, pad):
        y = lax.conv_general_dilated(
            x_, w_, window_strides=(1, 1), padding=[(pad, pad), (pad, pad)],
            dimension_numbers=("NCHW", "OIHW", "NCHW"))
        return y + b_.reshape(1, -1, 1, 1)

    def bn(y, g_, beta_, m_, v_):
        s = (g_ / jnp.sqrt(v_ + eps)).reshape(1, -1, 1, 1)
        return (y - m_.reshape(1, -1, 1, 1)) * s + beta_.reshape(1, -1, 1, 1)

    h = jnp.maximum(bn(conv(x, w1, b1, 1), g1, beta1, m1, v1), 0.0)
    h = bn(conv(h, w2, b2, 1), g2, beta2, m2, v2)
    idn = bn(conv(x, wi, bi, 0), gi, betai, mi, vi)
    return jnp.maximum(h + idn, 0.0)


if __name__ == "__main__":
    N, Cin, H, W = 2, 4, 16, 16
    Cout = 8

    key = jax.random.PRNGKey(0)
    ks = jax.random.split(key, 19)

    def conv_init(kw_, kb_, cout, cin, k):
        fan_in = cin * k * k
        bound = 1.0 / (fan_in ** 0.5)
        w_ = jax.random.uniform(kw_, (cout, cin, k, k), jnp.float32,
                                minval=-bound, maxval=bound)
        b_ = jax.random.uniform(kb_, (cout,), jnp.float32,
                                minval=-bound, maxval=bound)
        return w_, b_

    def bn_init(kg, kb2, km, kv, c):
        g_ = jax.random.uniform(kg, (c,), jnp.float32, minval=0.5, maxval=1.5)
        beta_ = 0.1 * jax.random.normal(kb2, (c,), jnp.float32)
        m_ = 0.1 * jax.random.normal(km, (c,), jnp.float32)
        v_ = jax.random.uniform(kv, (c,), jnp.float32, minval=0.5, maxval=1.5)
        return g_, beta_, m_, v_

    x = jax.random.normal(ks[0], (N, Cin, H, W), jnp.float32)
    w1, b1 = conv_init(ks[1], ks[2], Cout, Cin, 3)
    g1, beta1, m1, v1 = bn_init(ks[3], ks[4], ks[5], ks[6], Cout)
    w2, b2 = conv_init(ks[7], ks[8], Cout, Cout, 3)
    g2, beta2, m2, v2 = bn_init(ks[9], ks[10], ks[11], ks[12], Cout)
    wi, bi = conv_init(ks[13], ks[14], Cout, Cin, 1)
    gi, betai, mi, vi = bn_init(ks[15], ks[16], ks[17], ks[18], Cout)

    args = (x, w1, b1, g1, beta1, m1, v1,
            w2, b2, g2, beta2, m2, v2,
            wi, bi, gi, betai, mi, vi)

    out = jax.jit(double_conv_forward)(*args)
    out = jax.block_until_ready(out)

    ref = _reference(*args)
    assert out.shape == (N, Cout, H, W), out.shape
    err = float(jnp.max(jnp.abs(out - ref)))
    assert jnp.allclose(out, ref, atol=1e-3, rtol=1e-3), err

    print("KERNEL_OK")
</pallas_src>

<mosaic_0001>
module attributes {stable_mosaic.version = 11 : i64} {
  func.func @_double_conv_kernel(%arg0: i32, %arg1: memref<1x4x256xf32, #tpu.memory_space<vmem>>, %arg2: memref<9x8x4xf32, #tpu.memory_space<vmem>>, %arg3: memref<8x1xf32, #tpu.memory_space<vmem>>, %arg4: memref<9x8x8xf32, #tpu.memory_space<vmem>>, %arg5: memref<8x4xf32, #tpu.memory_space<vmem>>, %arg6: memref<8x1xf32, #tpu.memory_space<vmem>>, %arg7: memref<1x8x256xf32, #tpu.memory_space<vmem>>, %arg8: memref<4x512xf32, #tpu.memory_space<vmem>>, %arg9: memref<8x512xf32, #tpu.memory_space<vmem>>) attributes {dimension_semantics = [#tpu.dimension_semantics<parallel>], iteration_bounds = array<i64: 2>, scalar_prefetch = 0 : i64, scratch_operands = 2 : i64, tpu.core_type = #tpu.core_type<tc>, window_params = [{transform_indices = @transform_0, window_bounds = array<i64: 1, 4, 256>}, {pipeline_mode = #tpu.pipeline_mode<synchronous>, transform_indices = @transform_1, window_bounds = array<i64: 9, 8, 4>}, {pipeline_mode = #tpu.pipeline_mode<synchronous>, transform_indices = @transform_2, window_bounds = array<i64: 8, 1>}, {pipeline_mode = #tpu.pipeline_mode<synchronous>, transform_indices = @transform_3, window_bounds = array<i64: 9, 8, 8>}, {pipeline_mode = #tpu.pipeline_mode<synchronous>, transform_indices = @transform_4, window_bounds = array<i64: 8, 4>}, {pipeline_mode = #tpu.pipeline_mode<synchronous>, transform_indices = @transform_5, window_bounds = array<i64: 8, 1>}, {transform_indices = @transform_6, window_bounds = array<i64: 1, 8, 256>}]} {
    %0 = tpu.iota {dimensions = array<i32: 1>} : vector<1x512xi32>
    %c0_i32 = arith.constant 0 : i32
    %1 = vector.broadcast %c0_i32 : i32 to vector<1x512xi32>
    %2 = arith.addi %0, %1 : vector<1x512xi32>
    %c16_i32 = arith.constant 16 : i32
    %c0_i32_0 = arith.constant 0 : i32
    %3 = arith.cmpi eq, %c16_i32, %c0_i32_0 : i32
    %c1_i32 = arith.constant 1 : i32
    %4 = arith.select %3, %c1_i32, %c16_i32 : i32
    %5 = vector.broadcast %4 : i32 to vector<1x512xi32>
    %6 = arith.remsi %2, %5 : vector<1x512xi32>
    %c0_i32_1 = arith.constant 0 : i32
    %7 = vector.broadcast %c0_i32_1 : i32 to vector<1x512xi32>
    %8 = arith.cmpi ne, %6, %7 : vector<1x512xi32>
    %c0_i32_2 = arith.constant 0 : i32
    %9 = vector.broadcast %c0_i32_2 : i32 to vector<1x512xi32>
    %10 = arith.cmpi slt, %6, %9 : vector<1x512xi32>
    %c0_i32_3 = arith.constant 0 : i32
    %11 = arith.cmpi slt, %4, %c0_i32_3 : i32
    %12 = vector.broadcast %11 : i1 to vector<1x512xi1>
    %13 = vector.broadcast %12 : vector<1x512xi1> to vector<1x512xi1>
    %14 = arith.xori %10, %13 : vector<1x512xi1>
    %15 = arith.andi %14, %8 : vector<1x512xi1>
    %16 = vector.broadcast %4 : i32 to vector<1x512xi32>
    %17 = arith.addi %6, %16 : vector<1x512xi32>
    %18 = arith.select %15, %17, %6 : vector<1x512xi1>, vector<1x512xi32>
    %c15_i32 = arith.constant 15 : i32
    %19 = vector.broadcast %c15_i32 : i32 to vector<1x512xi32>
    %20 = arith.cmpi ne, %18, %19 : vector<1x512xi32>
    %c0_i32_4 = arith.constant 0 : i32
    %21 = vector.broadcast %c0_i32_4 : i32 to vector<1x512xi32>
    %22 = arith.cmpi ne, %18, %21 : vector<1x512xi32>
    %cst = arith.constant 0.000000e+00 : f32
    %23 = vector.broadcast %cst : f32 to vector<4x128xf32>
    %c0 = arith.constant 0 : index
    %c0_5 = arith.constant 0 : index
    %24 = vector.load %arg8[%c0, %c0_5] : memref<4x512xf32, #tpu.memory_space<vmem>>, vector<4x128xf32>
    tpu.vector_store %arg8[%c0, %c0_5], %23 {strides = array<i32>} : memref<4x512xf32, #tpu.memory_space<vmem>>, vector<4x128xf32>,
    %cst_6 = arith.constant 0.000000e+00 : f32
    %25 = vector.broadcast %cst_6 : f32 to vector<4x128xf32>
    %c0_7 = arith.constant 0 : index
    %c384 = arith.constant 384 : index
    %26 = vector.load %arg8[%c0_7, %c384] : memref<4x512xf32, #tpu.memory_space<vmem>>, vector<4x128xf32>
    tpu.vector_store %arg8[%c0_7, %c384], %25 {strides = array<i32>} : memref<4x512xf32, #tpu.memory_space<vmem>>, vector<4x128xf32>,
    %c0_8 = arith.constant 0 : index
    %c0_9 = arith.constant 0 : index
    %c0_10 = arith.constant 0 : index
    %27 = vector.load %arg1[%c0_8, %c0_9, %c0_10] : memref<1x4x256xf32, #tpu.memory_space<vmem>>, vector<1x4x256xf32>
    %28 = vector.shape_cast %27 : vector<1x4x256xf32> to vector<4x256xf32>
    %c0_11 = arith.constant 0 : index
    %c128 = arith.constant 128 : index
    %29 = vector.load %arg8[%c0_11, %c128] : memref<4x512xf32, #tpu.memory_space<vmem>>, vector<4x256xf32>
    tpu.vector_store %arg8[%c0_11, %c128], %28 {strides = array<i32>} : memref<4x512xf32, #tpu.memory_space<vmem>>, vector<4x256xf32>,
    %c0_12 = arith.constant 0 : index
    %c0_13 = arith.constant 0 : index
    %30 = vector.load %arg8[%c0_12, %c0_13] : memref<4x512xf32, #tpu.memory_space<vmem>>, vector<4x512xf32>
    %cst_14 = arith.constant 0.000000e+00 : f32
    %31 = vector.shape_cast %20 : vector<1x512xi1> to vector<1x512xi1>
    %32 = vector.broadcast %31 : vector<1x512xi1> to vector<4x512xi1>
    %33 = vector.broadcast %cst_14 : f32 to vector<4x512xf32>
    %34 = arith.select %32, %30, %33 : vector<4x512xi1>, vector<4x512xf32>
    %cst_15 = arith.constant 0.000000e+00 : f32
    %35 = vector.shape_cast %22 : vector<1x512xi1> to vector<1x512xi1>
    %36 = vector.broadcast %35 : vector<1x512xi1> to vector<4x512xi1>
    %37 = vector.broadcast %cst_15 : f32 to vector<4x512xf32>
    %38 = arith.select %36, %30, %37 : vector<4x512xi1>, vector<4x512xf32>
    %c0_16 = arith.constant 0 : index
    %c0_17 = arith.constant 0 : index
    %c0_18 = arith.constant 0 : index
    %39 = vector.load %arg2[%c0_16, %c0_17, %c0_18] : memref<9x8x4xf32, #tpu.memory_space<vmem>>, vector<1x8x4xf32>
    %40 = vector.shape_cast %39 : vector<1x8x4xf32> to vector<8x4xf32>
    %41 = vector.extract_strided_slice %34 {offsets = [0, 111], sizes = [4, 256], strides = [1, 1]} : vector<4x512xf32> to vector<4x256xf32>
    %cst_19 = arith.constant dense<0.000000e+00> : vector<8x256xf32>
    %42 = tpu.matmul %40, %41, %cst_19 {dimension_numbers = #tpu.dot_dimension_numbers<[1], [0], [0], [1], [0, 0, 1, 1], [], []>} : vector<8x4xf32>, vector<4x256xf32>, vector<8x256xf32> -> vector<8x256xf32>
    %c1 = arith.constant 1 : index
    %c0_20 = arith.constant 0 : index
    %c0_21 = arith.constant 0 : index
    %43 = vector.load %arg2[%c1, %c0_20, %c0_21] : memref<9x8x4xf32, #tpu.memory_space<vmem>>, vector<1x8x4xf32>
    %44 = vector.shape_cast %43 : vector<1x8x4xf32> to vector<8x4xf32>
    %45 = vector.extract_strided_slice %30 {offsets = [0, 112], sizes = [4, 256], strides = [1, 1]} : vector<4x512xf32> to vector<4x256xf32>
    %cst_22 = arith.constant dense<0.000000e+00> : vector<8x256xf32>
    %46 = tpu.matmul %44, %45, %cst_22 {dimension_numbers = #tpu.dot_dimension_numbers<[1], [0], [0], [1], [0, 0, 1, 1], [], []>} : vector<8x4xf32>, vector<4x256xf32>, vector<8x256xf32> -> vector<8x256xf32>
    %47 = arith.addf %42, %46 : vector<8x256xf32>
    %c2 = arith.constant 2 : index
    %c0_23 = arith.constant 0 : index
    %c0_24 = arith.constant 0 : index
    %48 = vector.load %arg2[%c2, %c0_23, %c0_24] : memref<9x8x4xf32, #tpu.memory_space<vmem>>, vector<1x8x4xf32>
    %49 = vector.shape_cast %48 : vector<1x8x4xf32> to vector<8x4xf32>
    %50 = vector.extract_strided_slice %38 {offsets = [0, 113], sizes = [4, 256], strides = [1, 1]} : vector<4x512xf32> to vector<4x256xf32>
    %cst_25 = arith.constant dense<0.000000e+00> : vector<8x256xf32>
    %51 = tpu.matmul %49, %50, %cst_25 {dimension_numbers = #tpu.dot_dimension_numbers<[1], [0], [0], [1], [0, 0, 1, 1], [], []>} : vector<8x4xf32>, vector<4x256xf32>, vector<8x256xf32> -> vector<8x256xf32>
    %52 = arith.addf %47, %51 : vector<8x256xf32>
    %c3 = arith.constant 3 : index
    %c0_26 = arith.constant 0 : index
    %c0_27 = arith.constant 0 : index
    %53 = vector.load %arg2[%c3, %c0_26, %c0_27] : memref<9x8x4xf32, #tpu.memory_space<vmem>>, vector<1x8x4xf32>
    %54 = vector.shape_cast %53 : vector<1x8x4xf32> to vector<8x4xf32>
    %55 = vector.extract_strided_slice %34 {offsets = [0, 127], sizes = [4, 256], strides = [1, 1]} : vector<4x512xf32> to vector<4x256xf32>
    %cst_28 = arith.constant dense<0.000000e+00> : vector<8x256xf32>
    %56 = tpu.matmul %54, %55, %cst_28 {dimension_numbers = #tpu.dot_dimension_numbers<[1], [0], [0], [1], [0, 0, 1, 1], [], []>} : vector<8x4xf32>, vector<4x256xf32>, vector<8x256xf32> -> vector<8x256xf32>
    %57 = arith.addf %52, %56 : vector<8x256xf32>
    %c4 = arith.constant 4 : index
    %c0_29 = arith.constant 0 : index
    %c0_30 = arith.constant 0 : index
    %58 = vector.load %arg2[%c4, %c0_29, %c0_30] : memref<9x8x4xf32, #tpu.memory_space<vmem>>, vector<1x8x4xf32>
    %59 = vector.shape_cast %58 : vector<1x8x4xf32> to vector<8x4xf32>
    %60 = vector.extract_strided_slice %30 {offsets = [0, 128], sizes = [4, 256], strides = [1, 1]} : vector<4x512xf32> to vector<4x256xf32>
    %cst_31 = arith.constant dense<0.000000e+00> : vector<8x256xf32>
    %61 = tpu.matmul %59, %60, %cst_31 {dimension_numbers = #tpu.dot_dimension_numbers<[1], [0], [0], [1], [0, 0, 1, 1], [], []>} : vector<8x4xf32>, vector<4x256xf32>, vector<8x256xf32> -> vector<8x256xf32>
    %62 = arith.addf %57, %61 : vector<8x256xf32>
    %c5 = arith.constant 5 : index
    %c0_32 = arith.constant 0 : index
    %c0_33 = arith.constant 0 : index
    %63 = vector.load %arg2[%c5, %c0_32, %c0_33] : memref<9x8x4xf32, #tpu.memory_space<vmem>>, vector<1x8x4xf32>
    %64 = vector.shape_cast %63 : vector<1x8x4xf32> to vector<8x4xf32>
    %65 = vector.extract_strided_slice %38 {offsets = [0, 129], sizes = [4, 256], strides = [1, 1]} : vector<4x512xf32> to vector<4x256xf32>
    %cst_34 = arith.constant dense<0.000000e+00> : vector<8x256xf32>
    %66 = tpu.matmul %64, %65, %cst_34 {dimension_numbers = #tpu.dot_dimension_numbers<[1], [0], [0], [1], [0, 0, 1, 1], [], []>} : vector<8x4xf32>, vector<4x256xf32>, vector<8x256xf32> -> vector<8x256xf32>
    %67 = arith.addf %62, %66 : vector<8x256xf32>
    %c6 = arith.constant 6 : index
    %c0_35 = arith.constant 0 : index
    %c0_36 = arith.constant 0 : index
    %68 = vector.load %arg2[%c6, %c0_35, %c0_36] : memref<9x8x4xf32, #tpu.memory_space<vmem>>, vector<1x8x4xf32>
    %69 = vector.shape_cast %68 : vector<1x8x4xf32> to vector<8x4xf32>
    %70 = vector.extract_strided_slice %34 {offsets = [0, 143], sizes = [4, 256], strides = [1, 1]} : vector<4x512xf32> to vector<4x256xf32>
    %cst_37 = arith.constant dense<0.000000e+00> : vector<8x256xf32>
    %71 = tpu.matmul %69, %70, %cst_37 {dimension_numbers = #tpu.dot_dimension_numbers<[1], [0], [0], [1], [0, 0, 1, 1], [], []>} : vector<8x4xf32>, vector<4x256xf32>, vector<8x256xf32> -> vector<8x256xf32>
    %72 = arith.addf %67, %71 : vector<8x256xf32>
    %c7 = arith.constant 7 : index
    %c0_38 = arith.constant 0 : index
    %c0_39 = arith.constant 0 : index
    %73 = vector.load %arg2[%c7, %c0_38, %c0_39] : memref<9x8x4xf32, #tpu.memory_space<vmem>>, vector<1x8x4xf32>
    %74 = vector.shape_cast %73 : vector<1x8x4xf32> to vector<8x4xf32>
    %75 = vector.extract_strided_slice %30 {offsets = [0, 144], sizes = [4, 256], strides = [1, 1]} : vector<4x512xf32> to vector<4x256xf32>
    %cst_40 = arith.constant dense<0.000000e+00> : vector<8x256xf32>
    %76 = tpu.matmul %74, %75, %cst_40 {dimension_numbers = #tpu.dot_dimension_numbers<[1], [0], [0], [1], [0, 0, 1, 1], [], []>} : vector<8x4xf32>, vector<4x256xf32>, vector<8x256xf32> -> vector<8x256xf32>
    %77 = arith.addf %72, %76 : vector<8x256xf32>
    %c8 = arith.constant 8 : index
    %c0_41 = arith.constant 0 : index
    %c0_42 = arith.constant 0 : index
    %78 = vector.load %arg2[%c8, %c0_41, %c0_42] : memref<9x8x4xf32, #tpu.memory_space<vmem>>, vector<1x8x4xf32>
    %79 = vector.shape_cast %78 : vector<1x8x4xf32> to vector<8x4xf32>
    %80 = vector.extract_strided_slice %38 {offsets = [0, 145], sizes = [4, 256], strides = [1, 1]} : vector<4x512xf32> to vector<4x256xf32>
    %cst_43 = arith.constant dense<0.000000e+00> : vector<8x256xf32>
    %81 = tpu.matmul %79, %80, %cst_43 {dimension_numbers = #tpu.dot_dimension_numbers<[1], [0], [0], [1], [0, 0, 1, 1], [], []>} : vector<8x4xf32>, vector<4x256xf32>, vector<8x256xf32> -> vector<8x256xf32>
    %82 = arith.addf %77, %81 : vector<8x256xf32>
    %c0_44 = arith.constant 0 : index
    %c0_45 = arith.constant 0 : index
    %83 = vector.load %arg3[%c0_44, %c0_45] : memref<8x1xf32, #tpu.memory_space<vmem>>, vector<8x1xf32>
    %84 = vector.broadcast %83 : vector<8x1xf32> to vector<8x256xf32>
    %85 = arith.addf %82, %84 : vector<8x256xf32>
    %cst_46 = arith.constant 0.000000e+00 : f32
    %86 = vector.broadcast %cst_46 : f32 to vector<8x256xf32>
    %87 = arith.maximumf %85, %86 : vector<8x256xf32>
    %cst_47 = arith.constant 0.000000e+00 : f32
    %88 = vector.broadcast %cst_47 : f32 to vector<8x128xf32>
    %c0_48 = arith.constant 0 : index
    %c0_49 = arith.constant 0 : index
    %89 = vector.load %arg9[%c0_48, %c0_49] : memref<8x512xf32, #tpu.memory_space<vmem>>, vector<8x128xf32>
    tpu.vector_store %arg9[%c0_48, %c0_49], %88 {strides = array<i32>} : memref<8x512xf32, #tpu.memory_space<vmem>>, vector<8x128xf32>,
    %cst_50 = arith.constant 0.000000e+00 : f32
    %90 = vector.broadcast %cst_50 : f32 to vector<8x128xf32>
    %c0_51 = arith.constant 0 : index
    %c384_52 = arith.constant 384 : index
    %91 = vector.load %arg9[%c0_51, %c384_52] : memref<8x512xf32, #tpu.memory_space<vmem>>, vector<8x128xf32>
    tpu.vector_store %arg9[%c0_51, %c384_52], %90 {strides = array<i32>} : memref<8x512xf32, #tpu.memory_space<vmem>>, vector<8x128xf32>,
    %c0_53 = arith.constant 0 : index
    %c128_54 = arith.constant 128 : index
    %92 = vector.load %arg9[%c0_53, %c128_54] : memref<8x512xf32, #tpu.memory_space<vmem>>, vector<8x256xf32>
    tpu.vector_store %arg9[%c0_53, %c128_54], %87 {strides = array<i32>} : memref<8x512xf32, #tpu.memory_space<vmem>>, vector<8x256xf32>,
    %c0_55 = arith.constant 0 : index
    %c0_56 = arith.constant 0 : index
    %93 = vector.load %arg9[%c0_55, %c0_56] : memref<8x512xf32, #tpu.memory_space<vmem>>, vector<8x512xf32>
    %cst_57 = arith.constant 0.000000e+00 : f32
    %94 = vector.shape_cast %20 : vector<1x512xi1> to vector<1x512xi1>
    %95 = vector.broadcast %94 : vector<1x512xi1> to vector<8x512xi1>
    %96 = vector.broadcast %cst_57 : f32 to vector<8x512xf32>
    %97 = arith.select %95, %93, %96 : vector<8x512xi1>, vector<8x512xf32>
    %cst_58 = arith.constant 0.000000e+00 : f32
    %98 = vector.shape_cast %22 : vector<1x512xi1> to vector<1x512xi1>
    %99 = vector.broadcast %98 : vector<1x512xi1> to vector<8x512xi1>
    %100 = vector.broadcast %cst_58 : f32 to vector<8x512xf32>
    %101 = arith.select %99, %93, %100 : vector<8x512xi1>, vector<8x512xf32>
    %c0_59 = arith.constant 0 : index
    %c0_60 = arith.constant 0 : index
    %102 = vector.load %arg5[%c0_59, %c0_60] : memref<8x4xf32, #tpu.memory_space<vmem>>, vector<8x4xf32>
    %cst_61 = arith.constant dense<0.000000e+00> : vector<8x256xf32>
    %103 = tpu.matmul %102, %28, %cst_61 {dimension_numbers = #tpu.dot_dimension_numbers<[1], [0], [0], [1], [0, 0, 1, 1], [], []>} : vector<8x4xf32>, vector<4x256xf32>, vector<8x256xf32> -> vector<8x256xf32>
    %c0_62 = arith.constant 0 : index
    %c0_63 = arith.constant 0 : index
    %c0_64 = arith.constant 0 : index
    %104 = vector.load %arg4[%c0_62, %c0_63, %c0_64] : memref<9x8x8xf32, #tpu.memory_space<vmem>>, vector<1x8x8xf32>
    %105 = vector.shape_cast %104 : vector<1x8x8xf32> to vector<8x8xf32>
    %106 = vector.extract_strided_slice %97 {offsets = [0, 111], sizes = [8, 256], strides = [1, 1]} : vector<8x512xf32> to vector<8x256xf32>
    %cst_65 = arith.constant dense<0.000000e+00> : vector<8x256xf32>
    %107 = tpu.matmul %105, %106, %cst_65 {dimension_numbers = #tpu.dot_dimension_numbers<[1], [0], [0], [1], [0, 0, 1, 1], [], []>} : vector<8x8xf32>, vector<8x256xf32>, vector<8x256xf32> -> vector<8x256xf32>
    %108 = arith.addf %103, %107 : vector<8x256xf32>
    %c1_66 = arith.constant 1 : index
    %c0_67 = arith.constant 0 : index
    %c0_68 = arith.constant 0 : index
    %109 = vector.load %arg4[%c1_66, %c0_67, %c0_68] : memref<9x8x8xf32, #tpu.memory_space<vmem>>, vector<1x8x8xf32>
    %110 = vector.shape_cast %109 : vector<1x8x8xf32> to vector<8x8xf32>
    %111 = vector.extract_strided_slice %93 {offsets = [0, 112], sizes = [8, 256], strides = [1, 1]} : vector<8x512xf32> to vector<8x256xf32>
    %cst_69 = arith.constant dense<0.000000e+00> : vector<8x256xf32>
    %112 = tpu.matmul %110, %111, %cst_69 {dimension_numbers = #tpu.dot_dimension_numbers<[1], [0], [0], [1], [0, 0, 1, 1], [], []>} : vector<8x8xf32>, vector<8x256xf32>, vector<8x256xf32> -> vector<8x256xf32>
    %113 = arith.addf %108, %112 : vector<8x256xf32>
    %c2_70 = arith.constant 2 : index
    %c0_71 = arith.constant 0 : index
    %c0_72 = arith.constant 0 : index
    %114 = vector.load %arg4[%c2_70, %c0_71, %c0_72] : memref<9x8x8xf32, #tpu.memory_space<vmem>>, vector<1x8x8xf32>
    %115 = vector.shape_cast %114 : vector<1x8x8xf32> to vector<8x8xf32>
    %116 = vector.extract_strided_slice %101 {offsets = [0, 113], sizes = [8, 256], strides = [1, 1]} : vector<8x512xf32> to vector<8x256xf32>
    %cst_73 = arith.constant dense<0.000000e+00> : vector<8x256xf32>
    %117 = tpu.matmul %115, %116, %cst_73 {dimension_numbers = #tpu.dot_dimension_numbers<[1], [0], [0], [1], [0, 0, 1, 1], [], []>} : vector<8x8xf32>, vector<8x256xf32>, vector<8x256xf32> -> vector<8x256xf32>
    %118 = arith.addf %113, %117 : vector<8x256xf32>
    %c3_74 = arith.constant 3 : index
    %c0_75 = arith.constant 0 : index
    %c0_76 = arith.constant 0 : index
    %119 = vector.load %arg4[%c3_74, %c0_75, %c0_76] : memref<9x8x8xf32, #tpu.memory_space<vmem>>, vector<1x8x8xf32>
    %120 = vector.shape_cast %119 : vector<1x8x8xf32> to vector<8x8xf32>
    %121 = vector.extract_strided_slice %97 {offsets = [0, 127], sizes = [8, 256], strides = [1, 1]} : vector<8x512xf32> to vector<8x256xf32>
    %cst_77 = arith.constant dense<0.000000e+00> : vector<8x256xf32>
    %122 = tpu.matmul %120, %121, %cst_77 {dimension_numbers = #tpu.dot_dimension_numbers<[1], [0], [0], [1], [0, 0, 1, 1], [], []>} : vector<8x8xf32>, vector<8x256xf32>, vector<8x256xf32> -> vector<8x256xf32>
    %123 = arith.addf %118, %122 : vector<8x256xf32>
    %c4_78 = arith.constant 4 : index
    %c0_79 = arith.constant 0 : index
    %c0_80 = arith.constant 0 : index
    %124 = vector.load %arg4[%c4_78, %c0_79, %c0_80] : memref<9x8x8xf32, #tpu.memory_space<vmem>>, vector<1x8x8xf32>
    %125 = vector.shape_cast %124 : vector<1x8x8xf32> to vector<8x8xf32>
    %126 = vector.extract_strided_slice %93 {offsets = [0, 128], sizes = [8, 256], strides = [1, 1]} : vector<8x512xf32> to vector<8x256xf32>
    %cst_81 = arith.constant dense<0.000000e+00> : vector<8x256xf32>
    %127 = tpu.matmul %125, %126, %cst_81 {dimension_numbers = #tpu.dot_dimension_numbers<[1], [0], [0], [1], [0, 0, 1, 1], [], []>} : vector<8x8xf32>, vector<8x256xf32>, vector<8x256xf32> -> vector<8x256xf32>
    %128 = arith.addf %123, %127 : vector<8x256xf32>
    %c5_82 = arith.constant 5 : index
    %c0_83 = arith.constant 0 : index
    %c0_84 = arith.constant 0 : index
    %129 = vector.load %arg4[%c5_82, %c0_83, %c0_84] : memref<9x8x8xf32, #tpu.memory_space<vmem>>, vector<1x8x8xf32>
    %130 = vector.shape_cast %129 : vector<1x8x8xf32> to vector<8x8xf32>
    %131 = vector.extract_strided_slice %101 {offsets = [0, 129], sizes = [8, 256], strides = [1, 1]} : vector<8x512xf32> to vector<8x256xf32>
    %cst_85 = arith.constant dense<0.000000e+00> : vector<8x256xf32>
    %132 = tpu.matmul %130, %131, %cst_85 {dimension_numbers = #tpu.dot_dimension_numbers<[1], [0], [0], [1], [0, 0, 1, 1], [], []>} : vector<8x8xf32>, vector<8x256xf32>, vector<8x256xf32> -> vector<8x256xf32>
    %133 = arith.addf %128, %132 : vector<8x256xf32>
    %c6_86 = arith.constant 6 : index
    %c0_87 = arith.constant 0 : index
    %c0_88 = arith.constant 0 : index
    %134 = vector.load %arg4[%c6_86, %c0_87, %c0_88] : memref<9x8x8xf32, #tpu.memory_space<vmem>>, vector<1x8x8xf32>
    %135 = vector.shape_cast %134 : vector<1x8x8xf32> to vector<8x8xf32>
    %136 = vector.extract_strided_slice %97 {offsets = [0, 143], sizes = [8, 256], strides = [1, 1]} : vector<8x512xf32> to vector<8x256xf32>
    %cst_89 = arith.constant dense<0.000000e+00> : vector<8x256xf32>
    %137 = tpu.matmul %135, %136, %cst_89 {dimension_numbers = #tpu.dot_dimension_numbers<[1], [0], [0], [1], [0, 0, 1, 1], [], []>} : vector<8x8xf32>, vector<8x256xf32>, vector<8x256xf32> -> vector<8x256xf32>
    %138 = arith.addf %133, %137 : vector<8x256xf32>
    %c7_90 = arith.constant 7 : index
    %c0_91 = arith.constant 0 : index
    %c0_92 = arith.constant 0 : index
    %139 = vector.load %arg4[%c7_90, %c0_91, %c0_92] : memref<9x8x8xf32, #tpu.memory_space<vmem>>, vector<1x8x8xf32>
    %140 = vector.shape_cast %139 : vector<1x8x8xf32> to vector<8x8xf32>
    %141 = vector.extract_strided_slice %93 {offsets = [0, 144], sizes = [8, 256], strides = [1, 1]} : vector<8x512xf32> to vector<8x256xf32>
    %cst_93 = arith.constant dense<0.000000e+00> : vector<8x256xf32>
    %142 = tpu.matmul %140, %141, %cst_93 {dimension_numbers = #tpu.dot_dimension_numbers<[1], [0], [0], [1], [0, 0, 1, 1], [], []>} : vector<8x8xf32>, vector<8x256xf32>, vector<8x256xf32> -> vector<8x256xf32>
    %143 = arith.addf %138, %142 : vector<8x256xf32>
    %c8_94 = arith.constant 8 : index
    %c0_95 = arith.constant 0 : index
    %c0_96 = arith.constant 0 : index
    %144 = vector.load %arg4[%c8_94, %c0_95, %c0_96] : memref<9x8x8xf32, #tpu.memory_space<vmem>>, vector<1x8x8xf32>
    %145 = vector.shape_cast %144 : vector<1x8x8xf32> to vector<8x8xf32>
    %146 = vector.extract_strided_slice %101 {offsets = [0, 145], sizes = [8, 256], strides = [1, 1]} : vector<8x512xf32> to vector<8x256xf32>
    %cst_97 = arith.constant dense<0.000000e+00> : vector<8x256xf32>
    %147 = tpu.matmul %145, %146, %cst_97 {dimension_numbers = #tpu.dot_dimension_numbers<[1], [0], [0], [1], [0, 0, 1, 1], [], []>} : vector<8x8xf32>, vector<8x256xf32>, vector<8x256xf32> -> vector<8x256xf32>
    %148 = arith.addf %143, %147 : vector<8x256xf32>
    %c0_98 = arith.constant 0 : index
    %c0_99 = arith.constant 0 : index
    %149 = vector.load %arg6[%c0_98, %c0_99] : memref<8x1xf32, #tpu.memory_space<vmem>>, vector<8x1xf32>
    %150 = vector.broadcast %149 : vector<8x1xf32> to vector<8x256xf32>
    %151 = arith.addf %148, %150 : vector<8x256xf32>
    %cst_100 = arith.constant 0.000000e+00 : f32
    %152 = vector.broadcast %cst_100 : f32 to vector<8x256xf32>
    %153 = arith.maximumf %151, %152 : vector<8x256xf32>
    %c0_101 = arith.constant 0 : index
    %c0_102 = arith.constant 0 : index
    %c0_103 = arith.constant 0 : index
    %154 = vector.load %arg7[%c0_101, %c0_102, %c0_103] : memref<1x8x256xf32, #tpu.memory_space<vmem>>, vector<1x8x256xf32>
    %155 = vector.shape_cast %154 : vector<1x8x256xf32> to vector<8x256xf32>
    %156 = vector.shape_cast %153 : vector<8x256xf32> to vector<1x8x256xf32>
    tpu.vector_store %arg7[%c0_101, %c0_102, %c0_103], %156 {strides = array<i32>} : memref<1x8x256xf32, #tpu.memory_space<vmem>>, vector<1x8x256xf32>,
    return
  }
  func.func @transform_0(%arg0: i32) -> (i32, i32, i32) {
    %c0_i32 = arith.constant 0 : i32
    %c0_i32_0 = arith.constant 0 : i32
    %c0_i32_1 = arith.constant 0 : i32
    return %arg0, %c0_i32, %c0_i32_0 : i32, i32, i32
  }
  func.func @transform_1(%arg0: i32) -> (i32, i32, i32) {
    %c0_i32 = arith.constant 0 : i32
    %c0_i32_0 = arith.constant 0 : i32
    %c0_i32_1 = arith.constant 0 : i32
    %c0_i32_2 = arith.constant 0 : i32
    return %c0_i32, %c0_i32_0, %c0_i32_1 : i32, i32, i32
  }
  func.func @transform_2(%arg0: i32) -> (i32, i32) {
    %c0_i32 = arith.constant 0 : i32
    %c0_i32_0 = arith.constant 0 : i32
    %c0_i32_1 = arith.constant 0 : i32
    return %c0_i32, %c0_i32_0 : i32, i32
  }
  func.func @transform_3(%arg0: i32) -> (i32, i32, i32) {
    %c0_i32 = arith.constant 0 : i32
    %c0_i32_0 = arith.constant 0 : i32
    %c0_i32_1 = arith.constant 0 : i32
    %c0_i32_2 = arith.constant 0 : i32
    return %c0_i32, %c0_i32_0, %c0_i32_1 : i32, i32, i32
  }
  func.func @transform_4(%arg0: i32) -> (i32, i32) {
    %c0_i32 = arith.constant 0 : i32
    %c0_i32_0 = arith.constant 0 : i32
    %c0_i32_1 = arith.constant 0 : i32
    return %c0_i32, %c0_i32_0 : i32, i32
  }
  func.func @transform_5(%arg0: i32) -> (i32, i32) {
    %c0_i32 = arith.constant 0 : i32
    %c0_i32_0 = arith.constant 0 : i32
    %c0_i32_1 = arith.constant 0 : i32
    return %c0_i32, %c0_i32_0 : i32, i32
  }
  func.func @transform_6(%arg0: i32) -> (i32, i32, i32) {
    %c0_i32 = arith.constant 0 : i32
    %c0_i32_0 = arith.constant 0 : i32
    %c0_i32_1 = arith.constant 0 : i32
    return %arg0, %c0_i32, %c0_i32_0 : i32, i32, i32
  }
}

</mosaic_0001>

<llo_original>
// kernel: double_conv_forward.1
$region0: #{double_conv_forward.1}
  #allocation0 [shape = 'u32[]', space=smem, size = 0x4, offset = 0x4, fixed_abs, tag = 'smem constant byte address 0x4 - core index']
  #allocation1 [shape = 'u32[144,128]{1,0:T(1,128)}', space=vmem, size = 0x12000, scoped, tag = 'internal scratch']
  #allocation2 [shape = 'f32[4,512]{1,0:T(4,128)}', space=vmem, size = 0x2000, scoped, tag = 'scratch operand']
  #allocation3 [shape = 'f32[8,512]{1,0:T(8,128)}', space=vmem, size = 0x4000, scoped, tag = 'scratch operand']
  %s0 = inlined_call_operand.vmem [shape: f32[2,4,256], index: 0, kind: input, shape index: {}]
  %s1 = inlined_call_operand.vmem [shape: f32[9,8,4], index: 1, kind: input, shape index: {}]
  %s2 = inlined_call_operand.vmem [shape: f32[8,1], index: 2, kind: input, shape index: {}]
  %s3 = inlined_call_operand.vmem [shape: f32[9,8,8], index: 3, kind: input, shape index: {}]
  %s4 = inlined_call_operand.vmem [shape: f32[8,4], index: 4, kind: input, shape index: {}]
  %s5 = inlined_call_operand.vmem [shape: f32[8,1], index: 5, kind: input, shape index: {}]
  %s6 = inlined_call_operand.vmem [shape: f32[2,8,256], index: 6, kind: output, shape index: {}]
  %s7 = sld [smem:[#allocation0]]
  $region57: #{double_conv_forward.1} parent=0
    _
  %s9 = ssub.s32 1, %s7
  %s10 = scalar_select 0, %s9, %s7
  loop: start=0, step=1, limit=4
  $region2: #{double_conv_forward.1} parent=0 // loop_pre_header
    _
  $region3: #{double_conv_forward.1} parent=0 // loop_header
    %s12 = sphi 0, %s16
    %p13 = scmp.ge.s32.totalorder %s12, 4
    %s22 = sphi 0, %s24
    %s25 = sphi 0, %s22
    %s26 = sphi 0, %s25
    %s42 = sphi 0, %s26
    %s46 = sphi 0, %s46
    %s48 = sphi 0, %s46
    %s49 = sphi 0, %s48
    %s63 = sphi 0, %s49
    %s67 = sphi 0, %s67
    %s69 = sphi 0, %s67
    %s70 = sphi 0, %s69
    %s84 = sphi 0, %s70
    %s88 = sphi 0, %s88
    %s90 = sphi 0, %s88
    %s91 = sphi 0, %s90
    %s105 = sphi 0, %s91
    %s109 = sphi 0, %s109
    %s111 = sphi 0, %s109
    %s112 = sphi 0, %s111
    %s126 = sphi 0, %s112
    %s130 = sphi 0, %s130
    %s132 = sphi 0, %s130
    %s133 = sphi 0, %s132
    %s147 = sphi 0, %s133
    %s153 = sphi 0, %s155
    %s156 = sphi 0, %s153
    %s157 = sphi 0, %s156
    %s173 = sphi 0, %s157
  $region4: #{double_conv_forward.1} parent=0 // loop_header_branch
    %15 = sbr.rel (%p13) target = $region8
  $region5: #{double_conv_forward.1} parent=0 // loop_body
    %s17 = ssub.s32 %s12, 1
    %s18 = ssub.s32 %s12, 2
    %s19 = sadd.s32 %s12, 1
    %s20 = ssub.s32 %s12, %s19
    %p21 = scmp.eq.s32.totalorder %s20, 0
    %s23 = sadd.s32 %s22, 1
    %s24 = scalar_select %p21, %s22, %s23
    %p27 = pneg %p21
    %p28 = scmp.eq.s32.totalorder %s12, 1
    %p29 = por %p27, %p28
    %p30 = scmp.ne.s32.totalorder %s22, %s25
    %p31 = scmp.eq.s32.totalorder %s12, 0
    %p32 = por %p30, %p31
    %p33 = scmp.ne.s32.totalorder %s22, %s25
    %p34 = scmp.eq.s32.totalorder %s17, 1
    %p35 = por %p33, %p34
    %p36 = scmp.ne.s32.totalorder %s25, %s26
    %p37 = scmp.eq.s32.totalorder %s17, 0
    %p38 = por %p36, %p37
    %p39 = scmp.ne.s32.totalorder %s25, %s26
    %p40 = scmp.eq.s32.totalorder %s18, 1
    %p41 = por %p39, %p40
    %p43 = scmp.ne.s32.totalorder %s26, %s42
    %p44 = scmp.eq.s32.totalorder %s18, 0
    %p45 = por %p43, %p44
    %s47 = sadd.s32 %s46, 1
    %p50 = scmp.eq.s32.totalorder %s12, 1
    %p51 = scmp.ne.s32.totalorder %s46, %s48
    %p52 = scmp.eq.s32.totalorder %s12, 0
    %p53 = por %p51, %p52
    %p54 = scmp.ne.s32.totalorder %s46, %s48
    %p55 = scmp.eq.s32.totalorder %s17, 1
    %p56 = por %p54, %p55
    %p57 = scmp.ne.s32.totalorder %s48, %s49
    %p58 = scmp.eq.s32.totalorder %s17, 0
    %p59 = por %p57, %p58
    %p60 = scmp.ne.s32.totalorder %s48, %s49
    %p61 = scmp.eq.s32.totalorder %s18, 1
    %p62 = por %p60, %p61
    %p64 = scmp.ne.s32.totalorder %s49, %s63
    %p65 = scmp.eq.s32.totalorder %s18, 0
    %p66 = por %p64, %p65
    %s68 = sadd.s32 %s67, 1
    %p71 = scmp.eq.s32.totalorder %s12, 1
    %p72 = scmp.ne.s32.totalorder %s67, %s69
    %p73 = scmp.eq.s32.totalorder %s12, 0
    %p74 = por %p72, %p73
    %p75 = scmp.ne.s32.totalorder %s67, %s69
    %p76 = scmp.eq.s32.totalorder %s17, 1
    %p77 = por %p75, %p76
    %p78 = scmp.ne.s32.totalorder %s69, %s70
    %p79 = scmp.eq.s32.totalorder %s17, 0
    %p80 = por %p78, %p79
    %p81 = scmp.ne.s32.totalorder %s69, %s70
    %p82 = scmp.eq.s32.totalorder %s18, 1
    %p83 = por %p81, %p82
    %p85 = scmp.ne.s32.totalorder %s70, %s84
    %p86 = scmp.eq.s32.totalorder %s18, 0
    %p87 = por %p85, %p86
    %s89 = sadd.s32 %s88, 1
    %p92 = scmp.eq.s32.totalorder %s12, 1
    %p93 = scmp.ne.s32.totalorder %s88, %s90
    %p94 = scmp.eq.s32.totalorder %s12, 0
    %p95 = por %p93, %p94
    %p96 = scmp.ne.s32.totalorder %s88, %s90
    %p97 = scmp.eq.s32.totalorder %s17, 1
    %p98 = por %p96, %p97
    %p99 = scmp.ne.s32.totalorder %s90, %s91
    %p100 = scmp.eq.s32.totalorder %s17, 0
    %p101 = por %p99, %p100
    %p102 = scmp.ne.s32.totalorder %s90, %s91
    %p103 = scmp.eq.s32.totalorder %s18, 1
    %p104 = por %p102, %p103
    %p106 = scmp.ne.s32.totalorder %s91, %s105
    %p107 = scmp.eq.s32.totalorder %s18, 0
    %p108 = por %p106, %p107
    %s110 = sadd.s32 %s109, 1
    %p113 = scmp.eq.s32.totalorder %s12, 1
    %p114 = scmp.ne.s32.totalorder %s109, %s111
    %p115 = scmp.eq.s32.totalorder %s12, 0
    %p116 = por %p114, %p115
    %p117 = scmp.ne.s32.totalorder %s109, %s111
    %p118 = scmp.eq.s32.totalorder %s17, 1
    %p119 = por %p117, %p118
    %p120 = scmp.ne.s32.totalorder %s111, %s112
    %p121 = scmp.eq.s32.totalorder %s17, 0
    %p122 = por %p120, %p121
    %p123 = scmp.ne.s32.totalorder %s111, %s112
    %p124 = scmp.eq.s32.totalorder %s18, 1
    %p125 = por %p123, %p124
    %p127 = scmp.ne.s32.totalorder %s112, %s126
    %p128 = scmp.eq.s32.totalorder %s18, 0
    %p129 = por %p127, %p128
    %s131 = sadd.s32 %s130, 1
    %p134 = scmp.eq.s32.totalorder %s12, 1
    %p135 = scmp.ne.s32.totalorder %s130, %s132
    %p136 = scmp.eq.s32.totalorder %s12, 0
    %p137 = por %p135, %p136
    %p138 = scmp.ne.s32.totalorder %s130, %s132
    %p139 = scmp.eq.s32.totalorder %s17, 1
    %p140 = por %p138, %p139
    %p141 = scmp.ne.s32.totalorder %s132, %s133
    %p142 = scmp.eq.s32.totalorder %s17, 0
    %p143 = por %p141, %p142
    %p144 = scmp.ne.s32.totalorder %s132, %s133
    %p145 = scmp.eq.s32.totalorder %s18, 1
    %p146 = por %p144, %p145
    %p148 = scmp.ne.s32.totalorder %s133, %s147
    %p149 = scmp.eq.s32.totalorder %s18, 0
    %p150 = por %p148, %p149
    %s151 = ssub.s32 %s12, %s19
    %p152 = scmp.eq.s32.totalorder %s151, 0
    %s154 = sadd.s32 %s153, 1
    %s155 = scalar_select %p152, %s153, %s154
    %p158 = pneg %p152
    %p159 = scmp.eq.s32.totalorder %s12, 1
    %p160 = por %p158, %p159
    %p161 = scmp.ne.s32.totalorder %s153, %s156
    %p162 = scmp.eq.s32.totalorder %s12, 0
    %p163 = por %p161, %p162
    %p164 = scmp.ne.s32.totalorder %s153, %s156
    %p165 = scmp.eq.s32.totalorder %s17, 1
    %p166 = por %p164, %p165
    %p167 = scmp.ne.s32.totalorder %s156, %s157
    %p168 = scmp.eq.s32.totalorder %s17, 0
    %p169 = por %p167, %p168
    %p170 = scmp.ne.s32.totalorder %s156, %s157
    %p171 = scmp.eq.s32.totalorder %s18, 1
    %p172 = por %p170, %p171
    %p174 = scmp.ne.s32.totalorder %s157, %s173
    %p175 = scmp.eq.s32.totalorder %s18, 0
    %p176 = por %p174, %p175
    %p177 = scmp.le.s32.totalorder 1, %s12
    %p178 = scmp.lt.s32.totalorder %s12, 3
    %p179 = pnand %p177, %p178
    %p180 = pneg %p179
    // Predicated region
    $region9: #{double_conv_forward.1} parent=5 // pred_check
      _
    $region10: #{double_conv_forward.1} parent=5 // pred_check_branch
      %182 = sbr.rel (%p179) target = $region12
    $region11: #{double_conv_forward.1} parent=5 // pred_region
      %s183 = ssub.s32 %s12, 1
      // Predicated region
      $region13: #{double_conv_forward.1} parent=11 // pred_check
        %p184 = pneg %p59
      $region14: #{double_conv_forward.1} parent=11 // pred_check_branch
        %186 = sbr.rel (%p184) target = $region16
      $region15: #{double_conv_forward.1} parent=11 // pred_region
        _
      $region16: #{double_conv_forward.1} parent=11 // pred_fallthru
        _
      // Predicated region
      $region17: #{double_conv_forward.1} parent=11 // pred_check
        %p187 = pneg %p80
      $region18: #{double_conv_forward.1} parent=11 // pred_check_branch
        %189 = sbr.rel (%p187) target = $region20
      $region19: #{double_conv_forward.1} parent=11 // pred_region
        _
      $region20: #{double_conv_forward.1} parent=11 // pred_fallthru
        _
      // Predicated region
      $region21: #{double_conv_forward.1} parent=11 // pred_check
        %p190 = pneg %p101
      $region22: #{double_conv_forward.1} parent=11 // pred_check_branch
        %192 = sbr.rel (%p190) target = $region24
      $region23: #{double_conv_forward.1} parent=11 // pred_region
        _
      $region24: #{double_conv_forward.1} parent=11 // pred_fallthru
        _
      // Predicated region
      $region25: #{double_conv_forward.1} parent=11 // pred_check
        %p193 = pneg %p122
      $region26: #{double_conv_forward.1} parent=11 // pred_check_branch
        %195 = sbr.rel (%p193) target = $region28
      $region27: #{double_conv_forward.1} parent=11 // pred_region
        _
      $region28: #{double_conv_forward.1} parent=11 // pred_fallthru
        _
      // Predicated region
      $region29: #{double_conv_forward.1} parent=11 // pred_check
        %p196 = pneg %p143
      $region30: #{double_conv_forward.1} parent=11 // pred_check_branch
        %198 = sbr.rel (%p196) target = $region32
      $region31: #{double_conv_forward.1} parent=11 // pred_region
        _
      $region32: #{double_conv_forward.1} parent=11 // pred_fallthru
        _
    $region12: #{double_conv_forward.1} parent=5 // pred_fallthru
      _
    %p199 = scmp.lt.s32.totalorder %s12, 2
    // Predicated region
    $region33: #{double_conv_forward.1} parent=5 // pred_check
      %p200 = pneg %p199
    $region34: #{double_conv_forward.1} parent=5 // pred_check_branch
      %202 = sbr.rel (%p200) target = $region36
    $region35: #{double_conv_forward.1} parent=5 // pred_region
      // Predicated region
      $region37: #{double_conv_forward.1} parent=35 // pred_check
        %p203 = pneg %p32
      $region38: #{double_conv_forward.1} parent=35 // pred_check_branch
        %205 = sbr.rel (%p203) target = $region40
      $region39: #{double_conv_forward.1} parent=35 // pred_region
        %p206 = scmp.lt.s32.totalorder %s12, 1
        %s207 = scalar_select %p206, %s12, 1
        %s208 = smul.addr %s207, 2
        %s209 = smul.addr %s208, 4
        %s210 = scalar_lea.vmem %s0, %s209
      $region40: #{double_conv_forward.1} parent=35 // pred_fallthru
        _
    $region36: #{double_conv_forward.1} parent=5 // pred_fallthru
      _
    %p211 = scmp.le.s32.totalorder 1, %s12
    %p212 = scmp.lt.s32.totalorder %s12, 3
    %p213 = pnand %p211, %p212
    %p214 = pneg %p213
    // Predicated region
    $region41: #{double_conv_forward.1} parent=5 // pred_check
      _
    $region42: #{double_conv_forward.1} parent=5 // pred_check_branch
      %216 = sbr.rel (%p213) target = $region44
    $region43: #{double_conv_forward.1} parent=5 // pred_region
      %s217 = ssub.s32 %s12, 1
      %p218 = scmp.lt.s32.totalorder %s17, 1
      %s219 = scalar_select %p218, %s17, 1
      %s220 = smul.addr %s219, 2
      %s221 = smul.addr %s220, 4
      %s222 = scalar_lea.vmem %s0, %s221
      %p223 = pneg %p38
      %p224 = pneg %p35
      %p225 = pneg %p59
      %p226 = pneg %p56
      %p227 = pneg %p80
      %p228 = pneg %p77
      %p229 = pneg %p101
      %p230 = pneg %p98
      %p231 = pneg %p122
      %p232 = pneg %p119
      %p233 = pneg %p143
      %p234 = pneg %p140
      %p235 = pneg %p169
      %p236 = pneg %p166
      %p237 = scmp.lt.s32.totalorder %s17, 1
      %s238 = scalar_select %p237, %s17, 1
      %s239 = smul.addr %s238, 2
      %s240 = smul.addr %s239, 8
      %s241 = scalar_lea.vmem %s6, %s240
      %p242 = scmp.lt.s32.totalorder %s17, 1
      %s243 = scalar_select %p242, %s17, 1
      %s244 = smul.addr %s243, 2
      %s245 = smul.addr %s244, 4
      %s246 = scalar_lea.vmem %s0, %s245
      %p247 = scmp.lt.s32.totalorder %s17, 1
      %s248 = scalar_select %p247, %s17, 1
      %s249 = smul.addr %s248, 2
      %s250 = smul.addr %s249, 8
      %s251 = scalar_lea.vmem %s6, %s250
      %v252 = vlaneseq
      %v253 = vand.u32 %v252, 127
      %v254 = vadd.s32 %v253, 128
      %v255 = vadd.s32 %v253, 256
      %v256 = vadd.s32 %v253, 384
      %vm257 = vcmp.lt.s32.totalorder %v253, 0
      %v258 = vsub.s32 0, %v253
      %v259 = vsel %vm257, %v258, %v253
      %v260 = vshrl.u32 %v259, 4
      %v261 = vand.u32 %v259, 15
      %v262 = vsub.s32 0, %v261
      %v263 = vsel %vm257, %v262, %v261
      %vm264 = vcmp.lt.s32.totalorder %v254, 0
      %v265 = vsub.s32 0, %v254
      %v266 = vsel %vm264, %v265, %v254
      %v267 = vshrl.u32 %v266, 4
      %v268 = vand.u32 %v266, 15
      %v269 = vsub.s32 0, %v268
      %v270 = vsel %vm264, %v269, %v268
      %vm271 = vcmp.lt.s32.totalorder %v255, 0
      %v272 = vsub.s32 0, %v255
      %v273 = vsel %vm271, %v272, %v255
      %v274 = vshrl.u32 %v273, 4
      %v275 = vand.u32 %v273, 15
      %v276 = vsub.s32 0, %v275
      %v277 = vsel %vm271, %v276, %v275
      %vm278 = vcmp.lt.s32.totalorder %v256, 0
      %v279 = vsub.s32 0, %v256
      %v280 = vsel %vm278, %v279, %v256
      %v281 = vshrl.u32 %v280, 4
      %v282 = vand.u32 %v280, 15
      %v283 = vsub.s32 0, %v282
      %v284 = vsel %vm278, %v283, %v282
      %vm285 = vcmp.ne.s32.totalorder %v263, 0
      %vm286 = vcmp.ne.s32.totalorder %v270, 0
      %vm287 = vcmp.ne.s32.totalorder %v277, 0
      %vm288 = vcmp.ne.s32.totalorder %v284, 0
      %vm289 = vcmp.lt.s32.totalorder %v263, 0
      %vm290 = vcmp.lt.s32.totalorder %v270, 0
      %vm291 = vcmp.lt.s32.totalorder %v277, 0
      %vm292 = vcmp.lt.s32.totalorder %v284, 0
      %vm293 = vmand %vm289, %vm285
      %vm294 = vmand %vm290, %vm286
      %vm295 = vmand %vm291, %vm287
      %vm296 = vmand %vm292, %vm288
      %v297 = vadd.s32 %v263, 16
      %v298 = vadd.s32 %v270, 16
      %v299 = vadd.s32 %v277, 16
      %v300 = vadd.s32 %v284, 16
      %v301 = vsel %vm293, %v297, %v263
      %v302 = vsel %vm294, %v298, %v270
      %v303 = vsel %vm295, %v299, %v277
      %v304 = vsel %vm296, %v300, %v284
      %vm305 = vcmp.ne.s32.totalorder %v301, 15
      %vm306 = vcmp.ne.s32.totalorder %v302, 15
      %vm307 = vcmp.ne.s32.totalorder %v303, 15
      %vm308 = vcmp.ne.s32.totalorder %v304, 15
      %vm309 = vcmp.ne.s32.totalorder %v301, 0
      %vm310 = vcmp.ne.s32.totalorder %v302, 0
      %vm311 = vcmp.ne.s32.totalorder %v303, 0
      %vm312 = vcmp.ne.s32.totalorder %v304, 0
      %313 = vst [vmem:[#allocation2] sm:$0xf] 0.0
      %314 = vst [vmem:[#allocation2 + $0xc] sm:$0xf] 0.0
      %v315 = vld [vmem:[%s246] sm:$0xff]
      %316 = vst [vmem:[#allocation2 + $0x4] sm:$0xff] %v315
      %v317 = vld [vmem:[#allocation2] sm:$0xff]
      %v318 = vld [vmem:[#allocation2 + $0x8] sm:$0xff]
      %v319 = vsel %vm305, 1, 0
      %v320 = vsel %vm306, 1, 0
      %v321 = vsel %vm307, 1, 0
      %v322 = vsel %vm308, 1, 0
      %vm323 = vcmp.eq.s32.totalorder %v319, 1
      %vm324 = vcmp.eq.s32.totalorder %v320, 1
      %vm325 = vcmp.eq.s32.totalorder %v321, 1
      %vm326 = vcmp.eq.s32.totalorder %v322, 1
      %v329 = vcombine.high %v317, %v317
      %v330 = vcombine.high %v318, %v318
      %v333 = vsel %vm323, %v317, 0.0
      %v334 = vsel %vm324, %v329, 0.0
      %v335 = vsel %vm325, %v318, 0.0
      %v336 = vsel %vm326, %v330, 0.0
      %v337 = vsel %vm309, 1, 0
      %v338 = vsel %vm310, 1, 0
      %v339 = vsel %vm311, 1, 0
      %v340 = vsel %vm312, 1, 0
      %vm341 = vcmp.eq.s32.totalorder %v337, 1
      %vm342 = vcmp.eq.s32.totalorder %v338, 1
      %vm343 = vcmp.eq.s32.totalorder %v339, 1
      %vm344 = vcmp.eq.s32.totalorder %v340, 1
      %v345 = vsel %vm341, %v317, 0.0
      %v346 = vsel %vm342, %v329, 0.0
      %v347 = vsel %vm343, %v318, 0.0
      %v348 = vsel %vm344, %v330, 0.0
      %v349 = vld [vmem:[%s1] sm:$0xff]
      %s350 = scalar_lea.vmem %s1, 8
      %v351 = vld [vmem:[%s350] sm:$0xff]
      %352 = vrot.lane.b32.xlu0 %v317, 16
      %v353 = vpop.permute.xlu0 %352
      %354 = vrot.lane.b32.xlu0 %v329, 16
      %v355 = vpop.permute.xlu0 %354
      %356 = vrot.lane.b32.xlu0 %v318, 16
      %v357 = vpop.permute.xlu0 %356
      %vm358 = vcmask 130048
      %v359 = vsel %vm358, %v353, %v355
      %v360 = vsel %vm358, %v355, %v357
      %vm361 = vcmask 31744
      %v363 = vsel %vm361, %v351, 0
      %vm365 = vcmask 1043456
      %v366 = vsel %vm365, %v359, 0
      %v368 = vsel %vm365, %v360, 0
      %370 = vmatprep.subr.mxu0 %v368
      %371 = vmatpush1.msra.mxu0 %v366
      %372 = vmatprep.subr.mxu0 0.0
      %373 = vmatpush1.msra.mxu0 0.0
      %374 = vmatprep.subr.mxu0 0.0
      %375 = vmatpush1.msra.mxu0 0.0
      %376 = vmatprep.subr.mxu0 0.0
      %377 = vmatpush1.msra.mxu0 0.0
      %378 = vmatprep.subr.mxu0 0.0
      %379 = vmatpush1.msra.mxu0 0.0
      %380 = vmatprep.subr.mxu0 0.0
      %381 = vmatpush1.msra.mxu0 0.0
      %382 = vmatprep.subr.mxu0 0.0
      %383 = vmatpush1.msra.mxu0 0.0
      %384 = vmatprep.subr.mxu0 0.0
      %385 = vmatpush1.msra.mxu0 0.0
      %386 = vmatprep.subr.mxu0 0.0
      %387 = vmatpush1.msra.mxu0 0.0
      %388 = vmatprep.subr.mxu0 0.0
      %389 = vmatpush1.msra.mxu0 0.0
      %390 = vmatprep.subr.mxu0 0.0
      %391 = vmatpush1.msra.mxu0 0.0
      %392 = vmatprep.subr.mxu0 0.0
      %393 = vmatpush1.msra.mxu0 0.0
      %394 = vmatprep.subr.mxu0 0.0
      %395 = vmatpush1.msra.mxu0 0.0
      %396 = vmatprep.subr.mxu0 0.0
      %397 = vmatpush1.msra.mxu0 0.0
      %398 = vmatprep.subr.mxu0 0.0
      %399 = vmatpush1.msra.mxu0 0.0
      %400 = vmatprep.subr.mxu0 0.0
      %401 = vmatpush1.msra.mxu0 0.0
      %402 = vmatprep.subr.mxu0 0.0
      %403 = vmatpush1.msra.mxu0 0.0
      %404 = vmatprep.subr.mxu0 0.0
      %405 = vmatpush1.msra.mxu0 0.0
      %406 = vmatprep.subr.mxu0 0.0
      %407 = vmatpush1.msra.mxu0 0.0
      %408 = vmatprep.subr.mxu0 0.0
      %409 = vmatpush1.msra.mxu0 0.0
      %410 = vmatprep.subr.mxu0 0.0
      %411 = vmatpush1.msra.mxu0 0.0
      %412 = vmatprep.subr.mxu0 0.0
      %413 = vmatpush1.msra.mxu0 0.0
      %414 = vmatprep.subr.mxu0 0.0
      %415 = vmatpush1.msra.mxu0 0.0
      %416 = vmatprep.subr.mxu0 0.0
      %417 = vmatpush1.msra.mxu0 0.0
      %418 = vmatprep.subr.mxu0 0.0
      %419 = vmatpush1.msra.mxu0 0.0
      %420 = vmatprep.subr.mxu0 0.0
      %421 = vmatpush1.msra.mxu0 0.0
      %422 = vmatprep.subr.mxu0 0.0
      %423 = vmatpush1.msra.mxu0 0.0
      %424 = vmatprep.subr.mxu0 0.0
      %425 = vmatpush1.msra.mxu0 0.0
      %426 = vmatprep.subr.mxu0 0.0
      %427 = vmatpush1.msra.mxu0 0.0
      %428 = vmatprep.subr.mxu0 0.0
      %429 = vmatpush1.msra.mxu0 0.0
      %430 = vmatprep.subr.mxu0 0.0
      %431 = vmatpush1.msra.mxu0 0.0
      %432 = vmatprep.subr.mxu0 0.0
      %433 = vmatpush1.msra.mxu0 0.0
      %434 = vmatprep.mubr.f32.mxu0 0.0
      %435 = vmatmul.mubr.f32.gmra.mrb[0].mxu0 %v363
      %v436 = vpop.f32.mrb[0].mxu0
      %v437 = vadd.f32 0.0, %v436
      %v438 = vpop.f32.mrb[0].mxu0
      %v439 = vadd.f32 0.0, %v438
      %440 = vdwg.mxu0
      %444 = vrot.lane.b32.xlu0 %v333, 17
      %v445 = vpop.permute.xlu0 %444
      %446 = vrot.lane.b32.xlu0 %v334, 17
      %v447 = vpop.permute.xlu0 %446
      %448 = vrot.lane.b32.xlu0 %v335, 17
      %v449 = vpop.permute.xlu0 %448
      %vm450 = vcmask 138240
      %v451 = vsel %vm450, %v445, %v447
      %v452 = vsel %vm450, %v447, %v449
      %v454 = vsel %vm361, %v349, 0
      %v456 = vsel %vm365, %v451, 0
      %v458 = vsel %vm365, %v452, 0
      %460 = vmatprep.subr.mxu0 %v458
      %461 = vmatpush1.msra.mxu0 %v456
      %462 = vmatprep.subr.mxu0 0.0
      %463 = vmatpush1.msra.mxu0 0.0
      %464 = vmatprep.subr.mxu0 0.0
      %465 = vmatpush1.msra.mxu0 0.0
      %466 = vmatprep.subr.mxu0 0.0
      %467 = vmatpush1.msra.mxu0 0.0
      %468 = vmatprep.subr.mxu0 0.0
      %469 = vmatpush1.msra.mxu0 0.0
      %470 = vmatprep.subr.mxu0 0.0
      %471 = vmatpush1.msra.mxu0 0.0
      %472 = vmatprep.subr.mxu0 0.0
      %473 = vmatpush1.msra.mxu0 0.0
      %474 = vmatprep.subr.mxu0 0.0
      %475 = vmatpush1.msra.mxu0 0.0
      %476 = vmatprep.subr.mxu0 0.0
      %477 = vmatpush1.msra.mxu0 0.0
      %478 = vmatprep.subr.mxu0 0.0
      %479 = vmatpush1.msra.mxu0 0.0
      %480 = vmatprep.subr.mxu0 0.0
      %481 = vmatpush1.msra.mxu0 0.0
      %482 = vmatprep.subr.mxu0 0.0
      %483 = vmatpush1.msra.mxu0 0.0
      %484 = vmatprep.subr.mxu0 0.0
      %485 = vmatpush1.msra.mxu0 0.0
      %486 = vmatprep.subr.mxu0 0.0
      %487 = vmatpush1.msra.mxu0 0.0
      %488 = vmatprep.subr.mxu0 0.0
      %489 = vmatpush1.msra.mxu0 0.0
      %490 = vmatprep.subr.mxu0 0.0
      %491 = vmatpush1.msra.mxu0 0.0
      %492 = vmatprep.subr.mxu0 0.0
      %493 = vmatpush1.msra.mxu0 0.0
      %494 = vmatprep.subr.mxu0 0.0
      %495 = vmatpush1.msra.mxu0 0.0
      %496 = vmatprep.subr.mxu0 0.0
      %497 = vmatpush1.msra.mxu0 0.0
      %498 = vmatprep.subr.mxu0 0.0
      %499 = vmatpush1.msra.mxu0 0.0
      %500 = vmatprep.subr.mxu0 0.0
      %501 = vmatpush1.msra.mxu0 0.0
      %502 = vmatprep.subr.mxu0 0.0
      %503 = vmatpush1.msra.mxu0 0.0
      %504 = vmatprep.subr.mxu0 0.0
      %505 = vmatpush1.msra.mxu0 0.0
      %506 = vmatprep.subr.mxu0 0.0
      %507 = vmatpush1.msra.mxu0 0.0
      %508 = vmatprep.subr.mxu0 0.0
      %509 = vmatpush1.msra.mxu0 0.0
      %510 = vmatprep.subr.mxu0 0.0
      %511 = vmatpush1.msra.mxu0 0.0
      %512 = vmatprep.subr.mxu0 0.0
      %513 = vmatpush1.msra.mxu0 0.0
      %514 = vmatprep.subr.mxu0 0.0
      %515 = vmatpush1.msra.mxu0 0.0
      %516 = vmatprep.subr.mxu0 0.0
      %517 = vmatpush1.msra.mxu0 0.0
      %518 = vmatprep.subr.mxu0 0.0
      %519 = vmatpush1.msra.mxu0 0.0
      %520 = vmatprep.subr.mxu0 0.0
      %521 = vmatpush1.msra.mxu0 0.0
      %522 = vmatprep.subr.mxu0 0.0
      %523 = vmatpush1.msra.mxu0 0.0
      %524 = vmatprep.mubr.f32.mxu0 0.0
      %525 = vmatmul.mubr.f32.gmra.mrb[0].mxu0 %v454
      %v526 = vpop.f32.mrb[0].mxu0
      %v527 = vadd.f32 %v437, %v526
      %v528 = vpop.f32.mrb[0].mxu0
      %v529 = vadd.f32 %v439, %v528
      %530 = vdwg.mxu0
      %s531 = scalar_lea.vmem %s1, 16
      %v532 = vld [vmem:[%s531] sm:$0xff]
      %536 = vrot.lane.b32.xlu0 %v345, 15
      %v537 = vpop.permute.xlu0 %536
      %538 = vrot.lane.b32.xlu0 %v346, 15
      %v539 = vpop.permute.xlu0 %538
      %540 = vrot.lane.b32.xlu0 %v347, 15
      %v541 = vpop.permute.xlu0 %540
      %vm542 = vcmask 121856
      %v543 = vsel %vm542, %v537, %v539
      %v544 = vsel %vm542, %v539, %v541
      %v546 = vsel %vm361, %v532, 0
      %v548 = vsel %vm365, %v543, 0
      %v550 = vsel %vm365, %v544, 0
      %552 = vmatprep.subr.mxu0 %v550
      %553 = vmatpush1.msra.mxu0 %v548
      %554 = vmatprep.subr.mxu0 0.0
      %555 = vmatpush1.msra.mxu0 0.0
      %556 = vmatprep.subr.mxu0 0.0
      %557 = vmatpush1.msra.mxu0 0.0
      %558 = vmatprep.subr.mxu0 0.0
      %559 = vmatpush1.msra.mxu0 0.0
      %560 = vmatprep.subr.mxu0 0.0
      %561 = vmatpush1.msra.mxu0 0.0
      %562 = vmatprep.subr.mxu0 0.0
      %563 = vmatpush1.msra.mxu0 0.0
      %564 = vmatprep.subr.mxu0 0.0
      %565 = vmatpush1.msra.mxu0 0.0
      %566 = vmatprep.subr.mxu0 0.0
      %567 = vmatpush1.msra.mxu0 0.0
      %568 = vmatprep.subr.mxu0 0.0
      %569 = vmatpush1.msra.mxu0 0.0
      %570 = vmatprep.subr.mxu0 0.0
      %571 = vmatpush1.msra.mxu0 0.0
      %572 = vmatprep.subr.mxu0 0.0
      %573 = vmatpush1.msra.mxu0 0.0
      %574 = vmatprep.subr.mxu0 0.0
      %575 = vmatpush1.msra.mxu0 0.0
      %576 = vmatprep.subr.mxu0 0.0
      %577 = vmatpush1.msra.mxu0 0.0
      %578 = vmatprep.subr.mxu0 0.0
      %579 = vmatpush1.msra.mxu0 0.0
      %580 = vmatprep.subr.mxu0 0.0
      %581 = vmatpush1.msra.mxu0 0.0
      %582 = vmatprep.subr.mxu0 0.0
      %583 = vmatpush1.msra.mxu0 0.0
      %584 = vmatprep.subr.mxu0 0.0
      %585 = vmatpush1.msra.mxu0 0.0
      %586 = vmatprep.subr.mxu0 0.0
      %587 = vmatpush1.msra.mxu0 0.0
      %588 = vmatprep.subr.mxu0 0.0
      %589 = vmatpush1.msra.mxu0 0.0
      %590 = vmatprep.subr.mxu0 0.0
      %591 = vmatpush1.msra.mxu0 0.0
      %592 = vmatprep.subr.mxu0 0.0
      %593 = vmatpush1.msra.mxu0 0.0
      %594 = vmatprep.subr.mxu0 0.0
      %595 = vmatpush1.msra.mxu0 0.0
      %596 = vmatprep.subr.mxu0 0.0
      %597 = vmatpush1.msra.mxu0 0.0
      %598 = vmatprep.subr.mxu0 0.0
      %599 = vmatpush1.msra.mxu0 0.0
      %600 = vmatprep.subr.mxu0 0.0
      %601 = vmatpush1.msra.mxu0 0.0
      %602 = vmatprep.subr.mxu0 0.0
      %603 = vmatpush1.msra.mxu0 0.0
      %604 = vmatprep.subr.mxu0 0.0
      %605 = vmatpush1.msra.mxu0 0.0
      %606 = vmatprep.subr.mxu0 0.0
      %607 = vmatpush1.msra.mxu0 0.0
      %608 = vmatprep.subr.mxu0 0.0
      %609 = vmatpush1.msra.mxu0 0.0
      %610 = vmatprep.subr.mxu0 0.0
      %611 = vmatpush1.msra.mxu0 0.0
      %612 = vmatprep.subr.mxu0 0.0
      %613 = vmatpush1.msra.mxu0 0.0
      %614 = vmatprep.subr.mxu0 0.0
      %615 = vmatpush1.msra.mxu0 0.0
      %616 = vmatprep.mubr.f32.mxu0 0.0
      %617 = vmatmul.mubr.f32.gmra.mrb[0].mxu0 %v546
      %v618 = vpop.f32.mrb[0].mxu0
      %v619 = vadd.f32 0.0, %v618
      %v620 = vpop.f32.mrb[0].mxu0
      %v621 = vadd.f32 0.0, %v620
      %622 = vdwg.mxu0
      %v623 = vadd.f32 %v527, %v619
      %v624 = vadd.f32 %v529, %v621
      %s625 = scalar_lea.vmem %s1, 24
      %v626 = vld [vmem:[%s625] sm:$0xff]
      %627 = vrot.lane.b32.xlu0 %v333, 1
      %v628 = vpop.permute.xlu0 %627
      %629 = vrot.lane.b32.xlu0 %v334, 1
      %v630 = vpop.permute.xlu0 %629
      %631 = vrot.lane.b32.xlu0 %v335, 1
      %v632 = vpop.permute.xlu0 %631
      %vm633 = vcmask 7168
      %v634 = vsel %vm633, %v628, %v630
      %v635 = vsel %vm633, %v630, %v632
      %v637 = vsel %vm361, %v626, 0
      %v639 = vsel %vm365, %v634, 0
      %v641 = vsel %vm365, %v635, 0
      %643 = vmatprep.subr.mxu0 %v641
      %644 = vmatpush1.msra.mxu0 %v639
      %645 = vmatprep.subr.mxu0 0.0
      %646 = vmatpush1.msra.mxu0 0.0
      %647 = vmatprep.subr.mxu0 0.0
      %648 = vmatpush1.msra.mxu0 0.0
      %649 = vmatprep.subr.mxu0 0.0
      %650 = vmatpush1.msra.mxu0 0.0
      %651 = vmatprep.subr.mxu0 0.0
      %652 = vmatpush1.msra.mxu0 0.0
      %653 = vmatprep.subr.mxu0 0.0
      %654 = vmatpush1.msra.mxu0 0.0
      %655 = vmatprep.subr.mxu0 0.0
      %656 = vmatpush1.msra.mxu0 0.0
      %657 = vmatprep.subr.mxu0 0.0
      %658 = vmatpush1.msra.mxu0 0.0
      %659 = vmatprep.subr.mxu0 0.0
      %660 = vmatpush1.msra.mxu0 0.0
      %661 = vmatprep.subr.mxu0 0.0
      %662 = vmatpush1.msra.mxu0 0.0
      %663 = vmatprep.subr.mxu0 0.0
      %664 = vmatpush1.msra.mxu0 0.0
      %665 = vmatprep.subr.mxu0 0.0
      %666 = vmatpush1.msra.mxu0 0.0
      %667 = vmatprep.subr.mxu0 0.0
      %668 = vmatpush1.msra.mxu0 0.0
      %669 = vmatprep.subr.mxu0 0.0
      %670 = vmatpush1.msra.mxu0 0.0
      %671 = vmatprep.subr.mxu0 0.0
      %672 = vmatpush1.msra.mxu0 0.0
      %673 = vmatprep.subr.mxu0 0.0
      %674 = vmatpush1.msra.mxu0 0.0
      %675 = vmatprep.subr.mxu0 0.0
      %676 = vmatpush1.msra.mxu0 0.0
      %677 = vmatprep.subr.mxu0 0.0
      %678 = vmatpush1.msra.mxu0 0.0
      %679 = vmatprep.subr.mxu0 0.0
      %680 = vmatpush1.msra.mxu0 0.0
      %681 = vmatprep.subr.mxu0 0.0
      %682 = vmatpush1.msra.mxu0 0.0
      %683 = vmatprep.subr.mxu0 0.0
      %684 = vmatpush1.msra.mxu0 0.0
      %685 = vmatprep.subr.mxu0 0.0
      %686 = vmatpush1.msra.mxu0 0.0
      %687 = vmatprep.subr.mxu0 0.0
      %688 = vmatpush1.msra.mxu0 0.0
      %689 = vmatprep.subr.mxu0 0.0
      %690 = vmatpush1.msra.mxu0 0.0
      %691 = vmatprep.subr.mxu0 0.0
      %692 = vmatpush1.msra.mxu0 0.0
      %693 = vmatprep.subr.mxu0 0.0
      %694 = vmatpush1.msra.mxu0 0.0
      %695 = vmatprep.subr.mxu0 0.0
      %696 = vmatpush1.msra.mxu0 0.0
      %697 = vmatprep.subr.mxu0 0.0
      %698 = vmatpush1.msra.mxu0 0.0
      %699 = vmatprep.subr.mxu0 0.0
      %700 = vmatpush1.msra.mxu0 0.0
      %701 = vmatprep.subr.mxu0 0.0
      %702 = vmatpush1.msra.mxu0 0.0
      %703 = vmatprep.subr.mxu0 0.0
      %704 = vmatpush1.msra.mxu0 0.0
      %705 = vmatprep.subr.mxu0 0.0
      %706 = vmatpush1.msra.mxu0 0.0
      %707 = vmatprep.mubr.f32.mxu0 0.0
      %708 = vmatmul.mubr.f32.gmra.mrb[0].mxu0 %v637
      %v709 = vpop.f32.mrb[0].mxu0
      %v710 = vadd.f32 0.0, %v709
      %v711 = vpop.f32.mrb[0].mxu0
      %v712 = vadd.f32 0.0, %v711
      %713 = vdwg.mxu0
      %v714 = vadd.f32 %v623, %v710
      %v715 = vadd.f32 %v624, %v712
      %s716 = scalar_lea.vmem %s1, 32
      %v717 = vld [vmem:[%s716] sm:$0xff]
      %v719 = vsel %vm361, %v717, 0
      %v721 = vsel %vm365, %v329, 0
      %v723 = vsel %vm365, %v318, 0
      %725 = vmatprep.subr.mxu0 %v723
      %726 = vmatpush1.msra.mxu0 %v721
      %727 = vmatprep.subr.mxu0 0.0
      %728 = vmatpush1.msra.mxu0 0.0
      %729 = vmatprep.subr.mxu0 0.0
      %730 = vmatpush1.msra.mxu0 0.0
      %731 = vmatprep.subr.mxu0 0.0
      %732 = vmatpush1.msra.mxu0 0.0
      %733 = vmatprep.subr.mxu0 0.0
      %734 = vmatpush1.msra.mxu0 0.0
      %735 = vmatprep.subr.mxu0 0.0
      %736 = vmatpush1.msra.mxu0 0.0
      %737 = vmatprep.subr.mxu0 0.0
      %738 = vmatpush1.msra.mxu0 0.0
      %739 = vmatprep.subr.mxu0 0.0
      %740 = vmatpush1.msra.mxu0 0.0
      %741 = vmatprep.subr.mxu0 0.0
      %742 = vmatpush1.msra.mxu0 0.0
      %743 = vmatprep.subr.mxu0 0.0
      %744 = vmatpush1.msra.mxu0 0.0
      %745 = vmatprep.subr.mxu0 0.0
      %746 = vmatpush1.msra.mxu0 0.0
      %747 = vmatprep.subr.mxu0 0.0
      %748 = vmatpush1.msra.mxu0 0.0
      %749 = vmatprep.subr.mxu0 0.0
      %750 = vmatpush1.msra.mxu0 0.0
      %751 = vmatprep.subr.mxu0 0.0
      %752 = vmatpush1.msra.mxu0 0.0
      %753 = vmatprep.subr.mxu0 0.0
      %754 = vmatpush1.msra.mxu0 0.0
      %755 = vmatprep.subr.mxu0 0.0
      %756 = vmatpush1.msra.mxu0 0.0
      %757 = vmatprep.subr.mxu0 0.0
      %758 = vmatpush1.msra.mxu0 0.0
      %759 = vmatprep.subr.mxu0 0.0
      %760 = vmatpush1.msra.mxu0 0.0
      %761 = vmatprep.subr.mxu0 0.0
      %762 = vmatpush1.msra.mxu0 0.0
      %763 = vmatprep.subr.mxu0 0.0
      %764 = vmatpush1.msra.mxu0 0.0
      %765 = vmatprep.subr.mxu0 0.0
      %766 = vmatpush1.msra.mxu0 0.0
      %767 = vmatprep.subr.mxu0 0.0
      %768 = vmatpush1.msra.mxu0 0.0
      %769 = vmatprep.subr.mxu0 0.0
      %770 = vmatpush1.msra.mxu0 0.0
      %771 = vmatprep.subr.mxu0 0.0
      %772 = vmatpush1.msra.mxu0 0.0
      %773 = vmatprep.subr.mxu0 0.0
      %774 = vmatpush1.msra.mxu0 0.0
      %775 = vmatprep.subr.mxu0 0.0
      %776 = vmatpush1.msra.mxu0 0.0
      %777 = vmatprep.subr.mxu0 0.0
      %778 = vmatpush1.msra.mxu0 0.0
      %779 = vmatprep.subr.mxu0 0.0
      %780 = vmatpush1.msra.mxu0 0.0
      %781 = vmatprep.subr.mxu0 0.0
      %782 = vmatpush1.msra.mxu0 0.0
      %783 = vmatprep.subr.mxu0 0.0
      %784 = vmatpush1.msra.mxu0 0.0
      %785 = vmatprep.subr.mxu0 0.0
      %786 = vmatpush1.msra.mxu0 0.0
      %787 = vmatprep.subr.mxu0 0.0
      %788 = vmatpush1.msra.mxu0 0.0
      %789 = vmatprep.mubr.f32.mxu0 0.0
      %790 = vmatmul.mubr.f32.gmra.mrb[0].mxu0 %v719
      %v791 = vpop.f32.mrb[0].mxu0
      %v792 = vadd.f32 0.0, %v791
      %v793 = vpop.f32.mrb[0].mxu0
      %v794 = vadd.f32 0.0, %v793
      %795 = vdwg.mxu0
      %v796 = vadd.f32 %v714, %v792
      %v797 = vadd.f32 %v715, %v794
      %s798 = scalar_lea.vmem %s1, 40
      %v799 = vld [vmem:[%s798] sm:$0xff]
      %801 = vrot.lane.b32.xlu0 %v346, 127
      %v802 = vpop.permute.xlu0 %801
      %803 = vrot.lane.b32.xlu0 %v347, 127
      %v804 = vpop.permute.xlu0 %803
      %805 = vrot.lane.b32.xlu0 %v348, 127
      %v806 = vpop.permute.xlu0 %805
      %vm807 = vcmask 1039360
      %v808 = vsel %vm807, %v802, %v804
      %v809 = vsel %vm807, %v804, %v806
      %v811 = vsel %vm361, %v799, 0
      %v813 = vsel %vm365, %v808, 0
      %v815 = vsel %vm365, %v809, 0
      %817 = vmatprep.subr.mxu0 %v815
      %818 = vmatpush1.msra.mxu0 %v813
      %819 = vmatprep.subr.mxu0 0.0
      %820 = vmatpush1.msra.mxu0 0.0
      %821 = vmatprep.subr.mxu0 0.0
      %822 = vmatpush1.msra.mxu0 0.0
      %823 = vmatprep.subr.mxu0 0.0
      %824 = vmatpush1.msra.mxu0 0.0
      %825 = vmatprep.subr.mxu0 0.0
      %826 = vmatpush1.msra.mxu0 0.0
      %827 = vmatprep.subr.mxu0 0.0
      %828 = vmatpush1.msra.mxu0 0.0
      %829 = vmatprep.subr.mxu0 0.0
      %830 = vmatpush1.msra.mxu0 0.0
      %831 = vmatprep.subr.mxu0 0.0
      %832 = vmatpush1.msra.mxu0 0.0
      %833 = vmatprep.subr.mxu0 0.0
      %834 = vmatpush1.msra.mxu0 0.0
      %835 = vmatprep.subr.mxu0 0.0
      %836 = vmatpush1.msra.mxu0 0.0
      %837 = vmatprep.subr.mxu0 0.0
      %838 = vmatpush1.msra.mxu0 0.0
      %839 = vmatprep.subr.mxu0 0.0
      %840 = vmatpush1.msra.mxu0 0.0
      %841 = vmatprep.subr.mxu0 0.0
      %842 = vmatpush1.msra.mxu0 0.0
      %843 = vmatprep.subr.mxu0 0.0
      %844 = vmatpush1.msra.mxu0 0.0
      %845 = vmatprep.subr.mxu0 0.0
      %846 = vmatpush1.msra.mxu0 0.0
      %847 = vmatprep.subr.mxu0 0.0
      %848 = vmatpush1.msra.mxu0 0.0
      %849 = vmatprep.subr.mxu0 0.0
      %850 = vmatpush1.msra.mxu0 0.0
      %851 = vmatprep.subr.mxu0 0.0
      %852 = vmatpush1.msra.mxu0 0.0
      %853 = vmatprep.subr.mxu0 0.0
      %854 = vmatpush1.msra.mxu0 0.0
      %855 = vmatprep.subr.mxu0 0.0
      %856 = vmatpush1.msra.mxu0 0.0
      %857 = vmatprep.subr.mxu0 0.0
      %858 = vmatpush1.msra.mxu0 0.0
      %859 = vmatprep.subr.mxu0 0.0
      %860 = vmatpush1.msra.mxu0 0.0
      %861 = vmatprep.subr.mxu0 0.0
      %862 = vmatpush1.msra.mxu0 0.0
      %863 = vmatprep.subr.mxu0 0.0
      %864 = vmatpush1.msra.mxu0 0.0
      %865 = vmatprep.subr.mxu0 0.0
      %866 = vmatpush1.msra.mxu0 0.0
      %867 = vmatprep.subr.mxu0 0.0
      %868 = vmatpush1.msra.mxu0 0.0
      %869 = vmatprep.subr.mxu0 0.0
      %870 = vmatpush1.msra.mxu0 0.0
      %871 = vmatprep.subr.mxu0 0.0
      %872 = vmatpush1.msra.mxu0 0.0
      %873 = vmatprep.subr.mxu0 0.0
      %874 = vmatpush1.msra.mxu0 0.0
      %875 = vmatprep.subr.mxu0 0.0
      %876 = vmatpush1.msra.mxu0 0.0
      %877 = vmatprep.subr.mxu0 0.0
      %878 = vmatpush1.msra.mxu0 0.0
      %879 = vmatprep.subr.mxu0 0.0
      %880 = vmatpush1.msra.mxu0 0.0
      %881 = vmatprep.mubr.f32.mxu0 0.0
      %882 = vmatmul.mubr.f32.gmra.mrb[0].mxu0 %v811
      %v883 = vpop.f32.mrb[0].mxu0
      %v884 = vadd.f32 0.0, %v883
      %v885 = vpop.f32.mrb[0].mxu0
      %v886 = vadd.f32 0.0, %v885
      %887 = vdwg.mxu0
      %v888 = vadd.f32 %v796, %v884
      %v889 = vadd.f32 %v797, %v886
      %s890 = scalar_lea.vmem %s1, 48
      %v891 = vld [vmem:[%s890] sm:$0xff]
      %893 = vrot.lane.b32.xlu0 %v334, 113
      %v894 = vpop.permute.xlu0 %893
      %895 = vrot.lane.b32.xlu0 %v335, 113
      %v896 = vpop.permute.xlu0 %895
      %897 = vrot.lane.b32.xlu0 %v336, 113
      %v898 = vpop.permute.xlu0 %897
      %vm899 = vcmask 924672
      %v900 = vsel %vm899, %v894, %v896
      %v901 = vsel %vm899, %v896, %v898
      %v903 = vsel %vm361, %v891, 0
      %v905 = vsel %vm365, %v900, 0
      %v907 = vsel %vm365, %v901, 0
      %909 = vmatprep.subr.mxu0 %v907
      %910 = vmatpush1.msra.mxu0 %v905
      %911 = vmatprep.subr.mxu0 0.0
      %912 = vmatpush1.msra.mxu0 0.0
      %913 = vmatprep.subr.mxu0 0.0
      %914 = vmatpush1.msra.mxu0 0.0
      %915 = vmatprep.subr.mxu0 0.0
      %916 = vmatpush1.msra.mxu0 0.0
      %917 = vmatprep.subr.mxu0 0.0
      %918 = vmatpush1.msra.mxu0 0.0
      %919 = vmatprep.subr.mxu0 0.0
      %920 = vmatpush1.msra.mxu0 0.0
      %921 = vmatprep.subr.mxu0 0.0
      %922 = vmatpush1.msra.mxu0 0.0
      %923 = vmatprep.subr.mxu0 0.0
      %924 = vmatpush1.msra.mxu0 0.0
      %925 = vmatprep.subr.mxu0 0.0
      %926 = vmatpush1.msra.mxu0 0.0
      %927 = vmatprep.subr.mxu0 0.0
      %928 = vmatpush1.msra.mxu0 0.0
      %929 = vmatprep.subr.mxu0 0.0
      %930 = vmatpush1.msra.mxu0 0.0
      %931 = vmatprep.subr.mxu0 0.0
      %932 = vmatpush1.msra.mxu0 0.0
      %933 = vmatprep.subr.mxu0 0.0
      %934 = vmatpush1.msra.mxu0 0.0
      %935 = vmatprep.subr.mxu0 0.0
      %936 = vmatpush1.msra.mxu0 0.0
      %937 = vmatprep.subr.mxu0 0.0
      %938 = vmatpush1.msra.mxu0 0.0
      %939 = vmatprep.subr.mxu0 0.0
      %940 = vmatpush1.msra.mxu0 0.0
      %941 = vmatprep.subr.mxu0 0.0
      %942 = vmatpush1.msra.mxu0 0.0
      %943 = vmatprep.subr.mxu0 0.0
      %944 = vmatpush1.msra.mxu0 0.0
      %945 = vmatprep.subr.mxu0 0.0
      %946 = vmatpush1.msra.mxu0 0.0
      %947 = vmatprep.subr.mxu0 0.0
      %948 = vmatpush1.msra.mxu0 0.0
      %949 = vmatprep.subr.mxu0 0.0
      %950 = vmatpush1.msra.mxu0 0.0
      %951 = vmatprep.subr.mxu0 0.0
      %952 = vmatpush1.msra.mxu0 0.0
      %953 = vmatprep.subr.mxu0 0.0
      %954 = vmatpush1.msra.mxu0 0.0
      %955 = vmatprep.subr.mxu0 0.0
      %956 = vmatpush1.msra.mxu0 0.0
      %957 = vmatprep.subr.mxu0 0.0
      %958 = vmatpush1.msra.mxu0 0.0
      %959 = vmatprep.subr.mxu0 0.0
      %960 = vmatpush1.msra.mxu0 0.0
      %961 = vmatprep.subr.mxu0 0.0
      %962 = vmatpush1.msra.mxu0 0.0
      %963 = vmatprep.subr.mxu0 0.0
      %964 = vmatpush1.msra.mxu0 0.0
      %965 = vmatprep.subr.mxu0 0.0
      %966 = vmatpush1.msra.mxu0 0.0
      %967 = vmatprep.subr.mxu0 0.0
      %968 = vmatpush1.msra.mxu0 0.0
      %969 = vmatprep.subr.mxu0 0.0
      %970 = vmatpush1.msra.mxu0 0.0
      %971 = vmatprep.subr.mxu0 0.0
      %972 = vmatpush1.msra.mxu0 0.0
      %973 = vmatprep.mubr.f32.mxu0 0.0
      %974 = vmatmul.mubr.f32.gmra.mrb[0].mxu0 %v903
      %v975 = vpop.f32.mrb[0].mxu0
      %v976 = vadd.f32 0.0, %v975
      %v977 = vpop.f32.mrb[0].mxu0
      %v978 = vadd.f32 0.0, %v977
      %979 = vdwg.mxu0
      %v980 = vadd.f32 %v888, %v976
      %v981 = vadd.f32 %v889, %v978
      %s982 = scalar_lea.vmem %s1, 56
      %v983 = vld [vmem:[%s982] sm:$0xff]
      %984 = vrot.lane.b32.xlu0 %v329, 112
      %v985 = vpop.permute.xlu0 %984
      %986 = vrot.lane.b32.xlu0 %v318, 112
      %v987 = vpop.permute.xlu0 %986
      %988 = vrot.lane.b32.xlu0 %v330, 112
      %v989 = vpop.permute.xlu0 %988
      %vm990 = vcmask 916480
      %v991 = vsel %vm990, %v985, %v987
      %v992 = vsel %vm990, %v987, %v989
      %v994 = vsel %vm361, %v983, 0
      %v996 = vsel %vm365, %v991, 0
      %v998 = vsel %vm365, %v992, 0
      %1000 = vmatprep.subr.mxu0 %v998
      %1001 = vmatpush1.msra.mxu0 %v996
      %1002 = vmatprep.subr.mxu0 0.0
      %1003 = vmatpush1.msra.mxu0 0.0
      %1004 = vmatprep.subr.mxu0 0.0
      %1005 = vmatpush1.msra.mxu0 0.0
      %1006 = vmatprep.subr.mxu0 0.0
      %1007 = vmatpush1.msra.mxu0 0.0
      %1008 = vmatprep.subr.mxu0 0.0
      %1009 = vmatpush1.msra.mxu0 0.0
      %1010 = vmatprep.subr.mxu0 0.0
      %1011 = vmatpush1.msra.mxu0 0.0
      %1012 = vmatprep.subr.mxu0 0.0
      %1013 = vmatpush1.msra.mxu0 0.0
      %1014 = vmatprep.subr.mxu0 0.0
      %1015 = vmatpush1.msra.mxu0 0.0
      %1016 = vmatprep.subr.mxu0 0.0
      %1017 = vmatpush1.msra.mxu0 0.0
      %1018 = vmatprep.subr.mxu0 0.0
      %1019 = vmatpush1.msra.mxu0 0.0
      %1020 = vmatprep.subr.mxu0 0.0
      %1021 = vmatpush1.msra.mxu0 0.0
      %1022 = vmatprep.subr.mxu0 0.0
      %1023 = vmatpush1.msra.mxu0 0.0
      %1024 = vmatprep.subr.mxu0 0.0
      %1025 = vmatpush1.msra.mxu0 0.0
      %1026 = vmatprep.subr.mxu0 0.0
      %1027 = vmatpush1.msra.mxu0 0.0
      %1028 = vmatprep.subr.mxu0 0.0
      %1029 = vmatpush1.msra.mxu0 0.0
      %1030 = vmatprep.subr.mxu0 0.0
      %1031 = vmatpush1.msra.mxu0 0.0
      %1032 = vmatprep.subr.mxu0 0.0
      %1033 = vmatpush1.msra.mxu0 0.0
      %1034 = vmatprep.subr.mxu0 0.0
      %1035 = vmatpush1.msra.mxu0 0.0
      %1036 = vmatprep.subr.mxu0 0.0
      %1037 = vmatpush1.msra.mxu0 0.0
      %1038 = vmatprep.subr.mxu0 0.0
      %1039 = vmatpush1.msra.mxu0 0.0
      %1040 = vmatprep.subr.mxu0 0.0
      %1041 = vmatpush1.msra.mxu0 0.0
      %1042 = vmatprep.subr.mxu0 0.0
      %1043 = vmatpush1.msra.mxu0 0.0
      %1044 = vmatprep.subr.mxu0 0.0
      %1045 = vmatpush1.msra.mxu0 0.0
      %1046 = vmatprep.subr.mxu0 0.0
      %1047 = vmatpush1.msra.mxu0 0.0
      %1048 = vmatprep.subr.mxu0 0.0
      %1049 = vmatpush1.msra.mxu0 0.0
      %1050 = vmatprep.subr.mxu0 0.0
      %1051 = vmatpush1.msra.mxu0 0.0
      %1052 = vmatprep.subr.mxu0 0.0
      %1053 = vmatpush1.msra.mxu0 0.0
      %1054 = vmatprep.subr.mxu0 0.0
      %1055 = vmatpush1.msra.mxu0 0.0
      %1056 = vmatprep.subr.mxu0 0.0
      %1057 = vmatpush1.msra.mxu0 0.0
      %1058 = vmatprep.subr.mxu0 0.0
      %1059 = vmatpush1.msra.mxu0 0.0
      %1060 = vmatprep.subr.mxu0 0.0
      %1061 = vmatpush1.msra.mxu0 0.0
      %1062 = vmatprep.subr.mxu0 0.0
      %1063 = vmatpush1.msra.mxu0 0.0
      %1064 = vmatprep.mubr.f32.mxu0 0.0
      %1065 = vmatmul.mubr.f32.gmra.mrb[0].mxu0 %v994
      %v1066 = vpop.f32.mrb[0].mxu0
      %v1067 = vadd.f32 0.0, %v1066
      %v1068 = vpop.f32.mrb[0].mxu0
      %v1069 = vadd.f32 0.0, %v1068
      %1070 = vdwg.mxu0
      %v1071 = vadd.f32 %v980, %v1067
      %v1072 = vadd.f32 %v981, %v1069
      %s1073 = scalar_lea.vmem %s1, 64
      %v1074 = vld [vmem:[%s1073] sm:$0xff]
      %1075 = vrot.lane.b32.xlu0 %v346, 111
      %v1076 = vpop.permute.xlu0 %1075
      %1077 = vrot.lane.b32.xlu0 %v347, 111
      %v1078 = vpop.permute.xlu0 %1077
      %1079 = vrot.lane.b32.xlu0 %v348, 111
      %v1080 = vpop.permute.xlu0 %1079
      %vm1081 = vcmask 908288
      %v1082 = vsel %vm1081, %v1076, %v1078
      %v1083 = vsel %vm1081, %v1078, %v1080
      %v1085 = vsel %vm361, %v1074, 0
      %v1087 = vsel %vm365, %v1082, 0
      %v1089 = vsel %vm365, %v1083, 0
      %1091 = vmatprep.subr.mxu0 %v1089
      %1092 = vmatpush1.msra.mxu0 %v1087
      %1093 = vmatprep.subr.mxu0 0.0
      %1094 = vmatpush1.msra.mxu0 0.0
      %1095 = vmatprep.subr.mxu0 0.0
      %1096 = vmatpush1.msra.mxu0 0.0
      %1097 = vmatprep.subr.mxu0 0.0
      %1098 = vmatpush1.msra.mxu0 0.0
      %1099 = vmatprep.subr.mxu0 0.0
      %1100 = vmatpush1.msra.mxu0 0.0
      %1101 = vmatprep.subr.mxu0 0.0
      %1102 = vmatpush1.msra.mxu0 0.0
      %1103 = vmatprep.subr.mxu0 0.0
      %1104 = vmatpush1.msra.mxu0 0.0
      %1105 = vmatprep.subr.mxu0 0.0
      %1106 = vmatpush1.msra.mxu0 0.0
      %1107 = vmatprep.subr.mxu0 0.0
      %1108 = vmatpush1.msra.mxu0 0.0
      %1109 = vmatprep.subr.mxu0 0.0
      %1110 = vmatpush1.msra.mxu0 0.0
      %1111 = vmatprep.subr.mxu0 0.0
      %1112 = vmatpush1.msra.mxu0 0.0
      %1113 = vmatprep.subr.mxu0 0.0
      %1114 = vmatpush1.msra.mxu0 0.0
      %1115 = vmatprep.subr.mxu0 0.0
      %1116 = vmatpush1.msra.mxu0 0.0
      %1117 = vmatprep.subr.mxu0 0.0
      %1118 = vmatpush1.msra.mxu0 0.0
      %1119 = vmatprep.subr.mxu0 0.0
      %1120 = vmatpush1.msra.mxu0 0.0
      %1121 = vmatprep.subr.mxu0 0.0
      %1122 = vmatpush1.msra.mxu0 0.0
      %1123 = vmatprep.subr.mxu0 0.0
      %1124 = vmatpush1.msra.mxu0 0.0
      %1125 = vmatprep.subr.mxu0 0.0
      %1126 = vmatpush1.msra.mxu0 0.0
      %1127 = vmatprep.subr.mxu0 0.0
      %1128 = vmatpush1.msra.mxu0 0.0
      %1129 = vmatprep.subr.mxu0 0.0
      %1130 = vmatpush1.msra.mxu0 0.0
      %1131 = vmatprep.subr.mxu0 0.0
      %1132 = vmatpush1.msra.mxu0 0.0
      %1133 = vmatprep.subr.mxu0 0.0
      %1134 = vmatpush1.msra.mxu0 0.0
      %1135 = vmatprep.subr.mxu0 0.0
      %1136 = vmatpush1.msra.mxu0 0.0
      %1137 = vmatprep.subr.mxu0 0.0
      %1138 = vmatpush1.msra.mxu0 0.0
      %1139 = vmatprep.subr.mxu0 0.0
      %1140 = vmatpush1.msra.mxu0 0.0
      %1141 = vmatprep.subr.mxu0 0.0
      %1142 = vmatpush1.msra.mxu0 0.0
      %1143 = vmatprep.subr.mxu0 0.0
      %1144 = vmatpush1.msra.mxu0 0.0
      %1145 = vmatprep.subr.mxu0 0.0
      %1146 = vmatpush1.msra.mxu0 0.0
      %1147 = vmatprep.subr.mxu0 0.0
      %1148 = vmatpush1.msra.mxu0 0.0
      %1149 = vmatprep.subr.mxu0 0.0
      %1150 = vmatpush1.msra.mxu0 0.0
      %1151 = vmatprep.subr.mxu0 0.0
      %1152 = vmatpush1.msra.mxu0 0.0
      %1153 = vmatprep.subr.mxu0 0.0
      %1154 = vmatpush1.msra.mxu0 0.0
      %1155 = vmatprep.mubr.f32.mxu0 0.0
      %1156 = vmatmul.mubr.f32.gmra.mrb[0].mxu0 %v1085
      %v1157 = vpop.f32.mrb[0].mxu0
      %v1158 = vadd.f32 0.0, %v1157
      %v1159 = vpop.f32.mrb[0].mxu0
      %v1160 = vadd.f32 0.0, %v1159
      %1161 = vdwg.mxu0
      %v1162 = vadd.f32 %v1071, %v1158
      %v1163 = vadd.f32 %v1072, %v1160
      %v1164 = vld [vmem:[%s2] sm:$0xff]
      %1166 = vset.pattern.permute.xlu0 0
      %1167 = vperm.xlu0 %1166, %v1164
      %v1168 = vpop.permute.xlu0 %1167
      %v1170 = vadd.f32 %v1162, %v1168
      %v1171 = vadd.f32 %v1163, %v1168
      %v1172 = vmax.f32 %v1170, 0.0
      %v1173 = vmax.f32 %v1171, 0.0
      %1174 = vst [vmem:[#allocation3] sm:$0xff] 0.0
      %1175 = vst [vmem:[#allocation3 + $0x18] sm:$0xff] 0.0
      %1176 = vst [vmem:[#allocation3 + $0x8] sm:$0xff] %v1172
      %1177 = vst [vmem:[#allocation3 + $0x10] sm:$0xff] %v1173
      %v1178 = vld [vmem:[#allocation3] sm:$0xff]
      %v1179 = vld [vmem:[#allocation3 + $0x8] sm:$0xff]
      %v1180 = vld [vmem:[#allocation3 + $0x10] sm:$0xff]
      %v1181 = vld [vmem:[#allocation3 + $0x18] sm:$0xff]
      %v1182 = vsel %vm323, %v1178, 0.0
      %v1183 = vsel %vm324, %v1179, 0.0
      %v1184 = vsel %vm325, %v1180, 0.0
      %v1185 = vsel %vm326, %v1181, 0.0
      %v1186 = vsel %vm341, %v1178, 0.0
      %v1187 = vsel %vm342, %v1179, 0.0
      %v1188 = vsel %vm343, %v1180, 0.0
      %v1189 = vsel %vm344, %v1181, 0.0
      %v1190 = vld [vmem:[%s4] sm:$0xff]
      %v1191 = vld [vmem:[%s3] sm:$0xff]
      %1195 = vrot.lane.b32.xlu0 %v1182, 17
      %v1196 = vpop.permute.xlu0 %1195
      %1197 = vrot.lane.b32.xlu0 %v1183, 17
      %v1198 = vpop.permute.xlu0 %1197
      %1199 = vrot.lane.b32.xlu0 %v1184, 17
      %v1200 = vpop.permute.xlu0 %1199
      %v1201 = vsel %vm450, %v1196, %v1198
      %v1202 = vsel %vm450, %v1198, %v1200
      %vm1205 = vcmask 64512
      %v1207 = vsel %vm1205, %v1191, 0
      %1209 = vmatprep.subr.mxu0 %v1202
      %1210 = vmatpush1.msra.mxu0 %v1201
      %1211 = vmatprep.subr.mxu0 0.0
      %1212 = vmatpush1.msra.mxu0 0.0
      %1213 = vmatprep.subr.mxu0 0.0
      %1214 = vmatpush1.msra.mxu0 0.0
      %1215 = vmatprep.subr.mxu0 0.0
      %1216 = vmatpush1.msra.mxu0 0.0
      %1217 = vmatprep.subr.mxu0 0.0
      %1218 = vmatpush1.msra.mxu0 0.0
      %1219 = vmatprep.subr.mxu0 0.0
      %1220 = vmatpush1.msra.mxu0 0.0
      %1221 = vmatprep.subr.mxu0 0.0
      %1222 = vmatpush1.msra.mxu0 0.0
      %1223 = vmatprep.subr.mxu0 0.0
      %1224 = vmatpush1.msra.mxu0 0.0
      %1225 = vmatprep.subr.mxu0 0.0
      %1226 = vmatpush1.msra.mxu0 0.0
      %1227 = vmatprep.subr.mxu0 0.0
      %1228 = vmatpush1.msra.mxu0 0.0
      %1229 = vmatprep.subr.mxu0 0.0
      %1230 = vmatpush1.msra.mxu0 0.0
      %1231 = vmatprep.subr.mxu0 0.0
      %1232 = vmatpush1.msra.mxu0 0.0
      %1233 = vmatprep.subr.mxu0 0.0
      %1234 = vmatpush1.msra.mxu0 0.0
      %1235 = vmatprep.subr.mxu0 0.0
      %1236 = vmatpush1.msra.mxu0 0.0
      %1237 = vmatprep.subr.mxu0 0.0
      %1238 = vmatpush1.msra.mxu0 0.0
      %1239 = vmatprep.subr.mxu0 0.0
      %1240 = vmatpush1.msra.mxu0 0.0
      %1241 = vmatprep.subr.mxu0 0.0
      %1242 = vmatpush1.msra.mxu0 0.0
      %1243 = vmatprep.subr.mxu0 0.0
      %1244 = vmatpush1.msra.mxu0 0.0
      %1245 = vmatprep.subr.mxu0 0.0
      %1246 = vmatpush1.msra.mxu0 0.0
      %1247 = vmatprep.subr.mxu0 0.0
      %1248 = vmatpush1.msra.mxu0 0.0
      %1249 = vmatprep.subr.mxu0 0.0
      %1250 = vmatpush1.msra.mxu0 0.0
      %1251 = vmatprep.subr.mxu0 0.0
      %1252 = vmatpush1.msra.mxu0 0.0
      %1253 = vmatprep.subr.mxu0 0.0
      %1254 = vmatpush1.msra.mxu0 0.0
      %1255 = vmatprep.subr.mxu0 0.0
      %1256 = vmatpush1.msra.mxu0 0.0
      %1257 = vmatprep.subr.mxu0 0.0
      %1258 = vmatpush1.msra.mxu0 0.0
      %1259 = vmatprep.subr.mxu0 0.0
      %1260 = vmatpush1.msra.mxu0 0.0
      %1261 = vmatprep.subr.mxu0 0.0
      %1262 = vmatpush1.msra.mxu0 0.0
      %1263 = vmatprep.subr.mxu0 0.0
      %1264 = vmatpush1.msra.mxu0 0.0
      %1265 = vmatprep.subr.mxu0 0.0
      %1266 = vmatpush1.msra.mxu0 0.0
      %1267 = vmatprep.subr.mxu0 0.0
      %1268 = vmatpush1.msra.mxu0 0.0
      %1269 = vmatprep.subr.mxu0 0.0
      %1270 = vmatpush1.msra.mxu0 0.0
      %1271 = vmatprep.subr.mxu0 0.0
      %1272 = vmatpush1.msra.mxu0 0.0
      %1273 = vmatprep.mubr.f32.mxu0 0.0
      %1274 = vmatmul.mubr.f32.gmra.mrb[0].mxu0 %v1207
      %v1275 = vpop.f32.mrb[0].mxu0
      %v1276 = vadd.f32 0.0, %v1275
      %v1277 = vpop.f32.mrb[0].mxu0
      %v1278 = vadd.f32 0.0, %v1277
      %1279 = vdwg.mxu0
      %v1281 = vcombine.high %v315, %v315
      %v1283 = vsel %vm361, %v1190, 0
      %v1285 = vsel %vm365, %v315, 0
      %v1287 = vsel %vm365, %v1281, 0
      %1289 = vmatprep.subr.mxu0 %v1287
      %1290 = vmatpush1.msra.mxu0 %v1285
      %1291 = vmatprep.subr.mxu0 0.0
      %1292 = vmatpush1.msra.mxu0 0.0
      %1293 = vmatprep.subr.mxu0 0.0
      %1294 = vmatpush1.msra.mxu0 0.0
      %1295 = vmatprep.subr.mxu0 0.0
      %1296 = vmatpush1.msra.mxu0 0.0
      %1297 = vmatprep.subr.mxu0 0.0
      %1298 = vmatpush1.msra.mxu0 0.0
      %1299 = vmatprep.subr.mxu0 0.0
      %1300 = vmatpush1.msra.mxu0 0.0
      %1301 = vmatprep.subr.mxu0 0.0
      %1302 = vmatpush1.msra.mxu0 0.0
      %1303 = vmatprep.subr.mxu0 0.0
      %1304 = vmatpush1.msra.mxu0 0.0
      %1305 = vmatprep.subr.mxu0 0.0
      %1306 = vmatpush1.msra.mxu0 0.0
      %1307 = vmatprep.subr.mxu0 0.0
      %1308 = vmatpush1.msra.mxu0 0.0
      %1309 = vmatprep.subr.mxu0 0.0
      %1310 = vmatpush1.msra.mxu0 0.0
      %1311 = vmatprep.subr.mxu0 0.0
      %1312 = vmatpush1.msra.mxu0 0.0
      %1313 = vmatprep.subr.mxu0 0.0
      %1314 = vmatpush1.msra.mxu0 0.0
      %1315 = vmatprep.subr.mxu0 0.0
      %1316 = vmatpush1.msra.mxu0 0.0
      %1317 = vmatprep.subr.mxu0 0.0
      %1318 = vmatpush1.msra.mxu0 0.0
      %1319 = vmatprep.subr.mxu0 0.0
      %1320 = vmatpush1.msra.mxu0 0.0
      %1321 = vmatprep.subr.mxu0 0.0
      %1322 = vmatpush1.msra.mxu0 0.0
      %1323 = vmatprep.subr.mxu0 0.0
      %1324 = vmatpush1.msra.mxu0 0.0
      %1325 = vmatprep.subr.mxu0 0.0
      %1326 = vmatpush1.msra.mxu0 0.0
      %1327 = vmatprep.subr.mxu0 0.0
      %1328 = vmatpush1.msra.mxu0 0.0
      %1329 = vmatprep.subr.mxu0 0.0
      %1330 = vmatpush1.msra.mxu0 0.0
      %1331 = vmatprep.subr.mxu0 0.0
      %1332 = vmatpush1.msra.mxu0 0.0
      %1333 = vmatprep.subr.mxu0 0.0
      %1334 = vmatpush1.msra.mxu0 0.0
      %1335 = vmatprep.subr.mxu0 0.0
      %1336 = vmatpush1.msra.mxu0 0.0
      %1337 = vmatprep.subr.mxu0 0.0
      %1338 = vmatpush1.msra.mxu0 0.0
      %1339 = vmatprep.subr.mxu0 0.0
      %1340 = vmatpush1.msra.mxu0 0.0
      %1341 = vmatprep.subr.mxu0 0.0
      %1342 = vmatpush1.msra.mxu0 0.0
      %1343 = vmatprep.subr.mxu0 0.0
      %1344 = vmatpush1.msra.mxu0 0.0
      %1345 = vmatprep.subr.mxu0 0.0
      %1346 = vmatpush1.msra.mxu0 0.0
      %1347 = vmatprep.subr.mxu0 0.0
      %1348 = vmatpush1.msra.mxu0 0.0
      %1349 = vmatprep.subr.mxu0 0.0
      %1350 = vmatpush1.msra.mxu0 0.0
      %1351 = vmatprep.subr.mxu0 0.0
      %1352 = vmatpush1.msra.mxu0 0.0
      %1353 = vmatprep.mubr.f32.mxu0 0.0
      %1354 = vmatmul.mubr.f32.gmra.mrb[0].mxu0 %v1283
      %v1355 = vpop.f32.mrb[0].mxu0
      %v1356 = vadd.f32 %v1276, %v1355
      %v1357 = vpop.f32.mrb[0].mxu0
      %v1358 = vadd.f32 %v1278, %v1357
      %1359 = vdwg.mxu0
      %s1360 = scalar_lea.vmem %s3, 8
      %v1361 = vld [vmem:[%s1360] sm:$0xff]
      %1365 = vrot.lane.b32.xlu0 %v1178, 16
      %v1366 = vpop.permute.xlu0 %1365
      %1367 = vrot.lane.b32.xlu0 %v1179, 16
      %v1368 = vpop.permute.xlu0 %1367
      %1369 = vrot.lane.b32.xlu0 %v1180, 16
      %v1370 = vpop.permute.xlu0 %1369
      %v1371 = vsel %vm358, %v1366, %v1368
      %v1372 = vsel %vm358, %v1368, %v1370
      %v1376 = vsel %vm1205, %v1361, 0
      %1378 = vmatprep.subr.mxu0 %v1372
      %1379 = vmatpush1.msra.mxu0 %v1371
      %1380 = vmatprep.subr.mxu0 0.0
      %1381 = vmatpush1.msra.mxu0 0.0
      %1382 = vmatprep.subr.mxu0 0.0
      %1383 = vmatpush1.msra.mxu0 0.0
      %1384 = vmatprep.subr.mxu0 0.0
      %1385 = vmatpush1.msra.mxu0 0.0
      %1386 = vmatprep.subr.mxu0 0.0
      %1387 = vmatpush1.msra.mxu0 0.0
      %1388 = vmatprep.subr.mxu0 0.0
      %1389 = vmatpush1.msra.mxu0 0.0
      %1390 = vmatprep.subr.mxu0 0.0
      %1391 = vmatpush1.msra.mxu0 0.0
      %1392 = vmatprep.subr.mxu0 0.0
      %1393 = vmatpush1.msra.mxu0 0.0
      %1394 = vmatprep.subr.mxu0 0.0
      %1395 = vmatpush1.msra.mxu0 0.0
      %1396 = vmatprep.subr.mxu0 0.0
      %1397 = vmatpush1.msra.mxu0 0.0
      %1398 = vmatprep.subr.mxu0 0.0
      %1399 = vmatpush1.msra.mxu0 0.0
      %1400 = vmatprep.subr.mxu0 0.0
      %1401 = vmatpush1.msra.mxu0 0.0
      %1402 = vmatprep.subr.mxu0 0.0
      %1403 = vmatpush1.msra.mxu0 0.0
      %1404 = vmatprep.subr.mxu0 0.0
      %1405 = vmatpush1.msra.mxu0 0.0
      %1406 = vmatprep.subr.mxu0 0.0
      %1407 = vmatpush1.msra.mxu0 0.0
      %1408 = vmatprep.subr.mxu0 0.0
      %1409 = vmatpush1.msra.mxu0 0.0
      %1410 = vmatprep.subr.mxu0 0.0
      %1411 = vmatpush1.msra.mxu0 0.0
      %1412 = vmatprep.subr.mxu0 0.0
      %1413 = vmatpush1.msra.mxu0 0.0
      %1414 = vmatprep.subr.mxu0 0.0
      %1415 = vmatpush1.msra.mxu0 0.0
      %1416 = vmatprep.subr.mxu0 0.0
      %1417 = vmatpush1.msra.mxu0 0.0
      %1418 = vmatprep.subr.mxu0 0.0
      %1419 = vmatpush1.msra.mxu0 0.0
      %1420 = vmatprep.subr.mxu0 0.0
      %1421 = vmatpush1.msra.mxu0 0.0
      %1422 = vmatprep.subr.mxu0 0.0
      %1423 = vmatpush1.msra.mxu0 0.0
      %1424 = vmatprep.subr.mxu0 0.0
      %1425 = vmatpush1.msra.mxu0 0.0
      %1426 = vmatprep.subr.mxu0 0.0
      %1427 = vmatpush1.msra.mxu0 0.0
      %1428 = vmatprep.subr.mxu0 0.0
      %1429 = vmatpush1.msra.mxu0 0.0
      %1430 = vmatprep.subr.mxu0 0.0
      %1431 = vmatpush1.msra.mxu0 0.0
      %1432 = vmatprep.subr.mxu0 0.0
      %1433 = vmatpush1.msra.mxu0 0.0
      %1434 = vmatprep.subr.mxu0 0.0
      %1435 = vmatpush1.msra.mxu0 0.0
      %1436 = vmatprep.subr.mxu0 0.0
      %1437 = vmatpush1.msra.mxu0 0.0
      %1438 = vmatprep.subr.mxu0 0.0
      %1439 = vmatpush1.msra.mxu0 0.0
      %1440 = vmatprep.subr.mxu0 0.0
      %1441 = vmatpush1.msra.mxu0 0.0
      %1442 = vmatprep.mubr.f32.mxu0 0.0
      %1443 = vmatmul.mubr.f32.gmra.mrb[0].mxu0 %v1376
      %v1444 = vpop.f32.mrb[0].mxu0
      %v1445 = vadd.f32 0.0, %v1444
      %v1446 = vpop.f32.mrb[0].mxu0
      %v1447 = vadd.f32 0.0, %v1446
      %1448 = vdwg.mxu0
      %v1449 = vadd.f32 %v1356, %v1445
      %v1450 = vadd.f32 %v1358, %v1447
      %s1451 = scalar_lea.vmem %s3, 16
      %v1452 = vld [vmem:[%s1451] sm:$0xff]
      %1456 = vrot.lane.b32.xlu0 %v1186, 15
      %v1457 = vpop.permute.xlu0 %1456
      %1458 = vrot.lane.b32.xlu0 %v1187, 15
      %v1459 = vpop.permute.xlu0 %1458
      %1460 = vrot.lane.b32.xlu0 %v1188, 15
      %v1461 = vpop.permute.xlu0 %1460
      %v1462 = vsel %vm542, %v1457, %v1459
      %v1463 = vsel %vm542, %v1459, %v1461
      %v1467 = vsel %vm1205, %v1452, 0
      %1469 = vmatprep.subr.mxu0 %v1463
      %1470 = vmatpush1.msra.mxu0 %v1462
      %1471 = vmatprep.subr.mxu0 0.0
      %1472 = vmatpush1.msra.mxu0 0.0
      %1473 = vmatprep.subr.mxu0 0.0
      %1474 = vmatpush1.msra.mxu0 0.0
      %1475 = vmatprep.subr.mxu0 0.0
      %1476 = vmatpush1.msra.mxu0 0.0
      %1477 = vmatprep.subr.mxu0 0.0
      %1478 = vmatpush1.msra.mxu0 0.0
      %1479 = vmatprep.subr.mxu0 0.0
      %1480 = vmatpush1.msra.mxu0 0.0
      %1481 = vmatprep.subr.mxu0 0.0
      %1482 = vmatpush1.msra.mxu0 0.0
      %1483 = vmatprep.subr.mxu0 0.0
      %1484 = vmatpush1.msra.mxu0 0.0
      %1485 = vmatprep.subr.mxu0 0.0
      %1486 = vmatpush1.msra.mxu0 0.0
      %1487 = vmatprep.subr.mxu0 0.0
      %1488 = vmatpush1.msra.mxu0 0.0
      %1489 = vmatprep.subr.mxu0 0.0
      %1490 = vmatpush1.msra.mxu0 0.0
      %1491 = vmatprep.subr.mxu0 0.0
      %1492 = vmatpush1.msra.mxu0 0.0
      %1493 = vmatprep.subr.mxu0 0.0
      %1494 = vmatpush1.msra.mxu0 0.0
      %1495 = vmatprep.subr.mxu0 0.0
      %1496 = vmatpush1.msra.mxu0 0.0
      %1497 = vmatprep.subr.mxu0 0.0
      %1498 = vmatpush1.msra.mxu0 0.0
      %1499 = vmatprep.subr.mxu0 0.0
      %1500 = vmatpush1.msra.mxu0 0.0
      %1501 = vmatprep.subr.mxu0 0.0
      %1502 = vmatpush1.msra.mxu0 0.0
      %1503 = vmatprep.subr.mxu0 0.0
      %1504 = vmatpush1.msra.mxu0 0.0
      %1505 = vmatprep.subr.mxu0 0.0
      %1506 = vmatpush1.msra.mxu0 0.0
      %1507 = vmatprep.subr.mxu0 0.0
      %1508 = vmatpush1.msra.mxu0 0.0
      %1509 = vmatprep.subr.mxu0 0.0
      %1510 = vmatpush1.msra.mxu0 0.0
      %1511 = vmatprep.subr.mxu0 0.0
      %1512 = vmatpush1.msra.mxu0 0.0
      %1513 = vmatprep.subr.mxu0 0.0
      %1514 = vmatpush1.msra.mxu0 0.0
      %1515 = vmatprep.subr.mxu0 0.0
      %1516 = vmatpush1.msra.mxu0 0.0
      %1517 = vmatprep.subr.mxu0 0.0
      %1518 = vmatpush1.msra.mxu0 0.0
      %1519 = vmatprep.subr.mxu0 0.0
      %1520 = vmatpush1.msra.mxu0 0.0
      %1521 = vmatprep.subr.mxu0 0.0
      %1522 = vmatpush1.msra.mxu0 0.0
      %1523 = vmatprep.subr.mxu0 0.0
      %1524 = vmatpush1.msra.mxu0 0.0
      %1525 = vmatprep.subr.mxu0 0.0
      %1526 = vmatpush1.msra.mxu0 0.0
      %1527 = vmatprep.subr.mxu0 0.0
      %1528 = vmatpush1.msra.mxu0 0.0
      %1529 = vmatprep.subr.mxu0 0.0
      %1530 = vmatpush1.msra.mxu0 0.0
      %1531 = vmatprep.subr.mxu0 0.0
      %1532 = vmatpush1.msra.mxu0 0.0
      %1533 = vmatprep.mubr.f32.mxu0 0.0
      %1534 = vmatmul.mubr.f32.gmra.mrb[0].mxu0 %v1467
      %v1535 = vpop.f32.mrb[0].mxu0
      %v1536 = vadd.f32 0.0, %v1535
      %v1537 = vpop.f32.mrb[0].mxu0
      %v1538 = vadd.f32 0.0, %v1537
      %1539 = vdwg.mxu0
      %v1540 = vadd.f32 %v1449, %v1536
      %v1541 = vadd.f32 %v1450, %v1538
      %s1542 = scalar_lea.vmem %s3, 24
      %v1543 = vld [vmem:[%s1542] sm:$0xff]
      %1544 = vrot.lane.b32.xlu0 %v1182, 1
      %v1545 = vpop.permute.xlu0 %1544
      %1546 = vrot.lane.b32.xlu0 %v1183, 1
      %v1547 = vpop.permute.xlu0 %1546
      %1548 = vrot.lane.b32.xlu0 %v1184, 1
      %v1549 = vpop.permute.xlu0 %1548
      %v1550 = vsel %vm633, %v1545, %v1547
      %v1551 = vsel %vm633, %v1547, %v1549
      %v1555 = vsel %vm1205, %v1543, 0
      %1557 = vmatprep.subr.mxu0 %v1551
      %1558 = vmatpush1.msra.mxu0 %v1550
      %1559 = vmatprep.subr.mxu0 0.0
      %1560 = vmatpush1.msra.mxu0 0.0
      %1561 = vmatprep.subr.mxu0 0.0
      %1562 = vmatpush1.msra.mxu0 0.0
      %1563 = vmatprep.subr.mxu0 0.0
      %1564 = vmatpush1.msra.mxu0 0.0
      %1565 = vmatprep.subr.mxu0 0.0
      %1566 = vmatpush1.msra.mxu0 0.0
      %1567 = vmatprep.subr.mxu0 0.0
      %1568 = vmatpush1.msra.mxu0 0.0
      %1569 = vmatprep.subr.mxu0 0.0
      %1570 = vmatpush1.msra.mxu0 0.0
      %1571 = vmatprep.subr.mxu0 0.0
      %1572 = vmatpush1.msra.mxu0 0.0
      %1573 = vmatprep.subr.mxu0 0.0
      %1574 = vmatpush1.msra.mxu0 0.0
      %1575 = vmatprep.subr.mxu0 0.0
      %1576 = vmatpush1.msra.mxu0 0.0
      %1577 = vmatprep.subr.mxu0 0.0
      %1578 = vmatpush1.msra.mxu0 0.0
      %1579 = vmatprep.subr.mxu0 0.0
      %1580 = vmatpush1.msra.mxu0 0.0
      %1581 = vmatprep.subr.mxu0 0.0
      %1582 = vmatpush1.msra.mxu0 0.0
      %1583 = vmatprep.subr.mxu0 0.0
      %1584 = vmatpush1.msra.mxu0 0.0
      %1585 = vmatprep.subr.mxu0 0.0
      %1586 = vmatpush1.msra.mxu0 0.0
      %1587 = vmatprep.subr.mxu0 0.0
      %1588 = vmatpush1.msra.mxu0 0.0
      %1589 = vmatprep.subr.mxu0 0.0
      %1590 = vmatpush1.msra.mxu0 0.0
      %1591 = vmatprep.subr.mxu0 0.0
      %1592 = vmatpush1.msra.mxu0 0.0
      %1593 = vmatprep.subr.mxu0 0.0
      %1594 = vmatpush1.msra.mxu0 0.0
      %1595 = vmatprep.subr.mxu0 0.0
      %1596 = vmatpush1.msra.mxu0 0.0
      %1597 = vmatprep.subr.mxu0 0.0
      %1598 = vmatpush1.msra.mxu0 0.0
      %1599 = vmatprep.subr.mxu0 0.0
      %1600 = vmatpush1.msra.mxu0 0.0
      %1601 = vmatprep.subr.mxu0 0.0
      %1602 = vmatpush1.msra.mxu0 0.0
      %1603 = vmatprep.subr.mxu0 0.0
      %1604 = vmatpush1.msra.mxu0 0.0
      %1605 = vmatprep.subr.mxu0 0.0
      %1606 = vmatpush1.msra.mxu0 0.0
      %1607 = vmatprep.subr.mxu0 0.0
      %1608 = vmatpush1.msra.mxu0 0.0
      %1609 = vmatprep.subr.mxu0 0.0
      %1610 = vmatpush1.msra.mxu0 0.0
      %1611 = vmatprep.subr.mxu0 0.0
      %1612 = vmatpush1.msra.mxu0 0.0
      %1613 = vmatprep.subr.mxu0 0.0
      %1614 = vmatpush1.msra.mxu0 0.0
      %1615 = vmatprep.subr.mxu0 0.0
      %1616 = vmatpush1.msra.mxu0 0.0
      %1617 = vmatprep.subr.mxu0 0.0
      %1618 = vmatpush1.msra.mxu0 0.0
      %1619 = vmatprep.subr.mxu0 0.0
      %1620 = vmatpush1.msra.mxu0 0.0
      %1621 = vmatprep.mubr.f32.mxu0 0.0
      %1622 = vmatmul.mubr.f32.gmra.mrb[0].mxu0 %v1555
      %v1623 = vpop.f32.mrb[0].mxu0
      %v1624 = vadd.f32 0.0, %v1623
      %v1625 = vpop.f32.mrb[0].mxu0
      %v1626 = vadd.f32 0.0, %v1625
      %1627 = vdwg.mxu0
      %v1628 = vadd.f32 %v1540, %v1624
      %v1629 = vadd.f32 %v1541, %v1626
      %s1630 = scalar_lea.vmem %s3, 32
      %v1631 = vld [vmem:[%s1630] sm:$0xff]
      %v1633 = vsel %vm1205, %v1631, 0
      %1635 = vmatprep.subr.mxu0 %v1180
      %1636 = vmatpush1.msra.mxu0 %v1179
      %1637 = vmatprep.subr.mxu0 0.0
      %1638 = vmatpush1.msra.mxu0 0.0
      %1639 = vmatprep.subr.mxu0 0.0
      %1640 = vmatpush1.msra.mxu0 0.0
      %1641 = vmatprep.subr.mxu0 0.0
      %1642 = vmatpush1.msra.mxu0 0.0
      %1643 = vmatprep.subr.mxu0 0.0
      %1644 = vmatpush1.msra.mxu0 0.0
      %1645 = vmatprep.subr.mxu0 0.0
      %1646 = vmatpush1.msra.mxu0 0.0
      %1647 = vmatprep.subr.mxu0 0.0
      %1648 = vmatpush1.msra.mxu0 0.0
      %1649 = vmatprep.subr.mxu0 0.0
      %1650 = vmatpush1.msra.mxu0 0.0
      %1651 = vmatprep.subr.mxu0 0.0
      %1652 = vmatpush1.msra.mxu0 0.0
      %1653 = vmatprep.subr.mxu0 0.0
      %1654 = vmatpush1.msra.mxu0 0.0
      %1655 = vmatprep.subr.mxu0 0.0
      %1656 = vmatpush1.msra.mxu0 0.0
      %1657 = vmatprep.subr.mxu0 0.0
      %1658 = vmatpush1.msra.mxu0 0.0
      %1659 = vmatprep.subr.mxu0 0.0
      %1660 = vmatpush1.msra.mxu0 0.0
      %1661 = vmatprep.subr.mxu0 0.0
      %1662 = vmatpush1.msra.mxu0 0.0
      %1663 = vmatprep.subr.mxu0 0.0
      %1664 = vmatpush1.msra.mxu0 0.0
      %1665 = vmatprep.subr.mxu0 0.0
      %1666 = vmatpush1.msra.mxu0 0.0
      %1667 = vmatprep.subr.mxu0 0.0
      %1668 = vmatpush1.msra.mxu0 0.0
      %1669 = vmatprep.subr.mxu0 0.0
      %1670 = vmatpush1.msra.mxu0 0.0
      %1671 = vmatprep.subr.mxu0 0.0
      %1672 = vmatpush1.msra.mxu0 0.0
      %1673 = vmatprep.subr.mxu0 0.0
      %1674 = vmatpush1.msra.mxu0 0.0
      %1675 = vmatprep.subr.mxu0 0.0
      %1676 = vmatpush1.msra.mxu0 0.0
      %1677 = vmatprep.subr.mxu0 0.0
      %1678 = vmatpush1.msra.mxu0 0.0
      %1679 = vmatprep.subr.mxu0 0.0
      %1680 = vmatpush1.msra.mxu0 0.0
      %1681 = vmatprep.subr.mxu0 0.0
      %1682 = vmatpush1.msra.mxu0 0.0
      %1683 = vmatprep.subr.mxu0 0.0
      %1684 = vmatpush1.msra.mxu0 0.0
      %1685 = vmatprep.subr.mxu0 0.0
      %1686 = vmatpush1.msra.mxu0 0.0
      %1687 = vmatprep.subr.mxu0 0.0
      %1688 = vmatpush1.msra.mxu0 0.0
      %1689 = vmatprep.subr.mxu0 0.0
      %1690 = vmatpush1.msra.mxu0 0.0
      %1691 = vmatprep.subr.mxu0 0.0
      %1692 = vmatpush1.msra.mxu0 0.0
      %1693 = vmatprep.subr.mxu0 0.0
      %1694 = vmatpush1.msra.mxu0 0.0
      %1695 = vmatprep.subr.mxu0 0.0
      %1696 = vmatpush1.msra.mxu0 0.0
      %1697 = vmatprep.subr.mxu0 0.0
      %1698 = vmatpush1.msra.mxu0 0.0
      %1699 = vmatprep.mubr.f32.mxu0 0.0
      %1700 = vmatmul.mubr.f32.gmra.mrb[0].mxu0 %v1633
      %v1701 = vpop.f32.mrb[0].mxu0
      %v1702 = vadd.f32 0.0, %v1701
      %v1703 = vpop.f32.mrb[0].mxu0
      %v1704 = vadd.f32 0.0, %v1703
      %1705 = vdwg.mxu0
      %v1706 = vadd.f32 %v1628, %v1702
      %v1707 = vadd.f32 %v1629, %v1704
      %s1708 = scalar_lea.vmem %s3, 40
      %v1709 = vld [vmem:[%s1708] sm:$0xff]
      %1711 = vrot.lane.b32.xlu0 %v1187, 127
      %v1712 = vpop.permute.xlu0 %1711
      %1713 = vrot.lane.b32.xlu0 %v1188, 127
      %v1714 = vpop.permute.xlu0 %1713
      %1715 = vrot.lane.b32.xlu0 %v1189, 127
      %v1716 = vpop.permute.xlu0 %1715
      %v1717 = vsel %vm807, %v1712, %v1714
      %v1718 = vsel %vm807, %v1714, %v1716
      %v1722 = vsel %vm1205, %v1709, 0
      %1724 = vmatprep.subr.mxu0 %v1718
      %1725 = vmatpush1.msra.mxu0 %v1717
      %1726 = vmatprep.subr.mxu0 0.0
      %1727 = vmatpush1.msra.mxu0 0.0
      %1728 = vmatprep.subr.mxu0 0.0
      %1729 = vmatpush1.msra.mxu0 0.0
      %1730 = vmatprep.subr.mxu0 0.0
      %1731 = vmatpush1.msra.mxu0 0.0
      %1732 = vmatprep.subr.mxu0 0.0
      %1733 = vmatpush1.msra.mxu0 0.0
      %1734 = vmatprep.subr.mxu0 0.0
      %1735 = vmatpush1.msra.mxu0 0.0
      %1736 = vmatprep.subr.mxu0 0.0
      %1737 = vmatpush1.msra.mxu0 0.0
      %1738 = vmatprep.subr.mxu0 0.0
      %1739 = vmatpush1.msra.mxu0 0.0
      %1740 = vmatprep.subr.mxu0 0.0
      %1741 = vmatpush1.msra.mxu0 0.0
      %1742 = vmatprep.subr.mxu0 0.0
      %1743 = vmatpush1.msra.mxu0 0.0
      %1744 = vmatprep.subr.mxu0 0.0
      %1745 = vmatpush1.msra.mxu0 0.0
      %1746 = vmatprep.subr.mxu0 0.0
      %1747 = vmatpush1.msra.mxu0 0.0
      %1748 = vmatprep.subr.mxu0 0.0
      %1749 = vmatpush1.msra.mxu0 0.0
      %1750 = vmatprep.subr.mxu0 0.0
      %1751 = vmatpush1.msra.mxu0 0.0
      %1752 = vmatprep.subr.mxu0 0.0
      %1753 = vmatpush1.msra.mxu0 0.0
      %1754 = vmatprep.subr.mxu0 0.0
      %1755 = vmatpush1.msra.mxu0 0.0
      %1756 = vmatprep.subr.mxu0 0.0
      %1757 = vmatpush1.msra.mxu0 0.0
      %1758 = vmatprep.subr.mxu0 0.0
      %1759 = vmatpush1.msra.mxu0 0.0
      %1760 = vmatprep.subr.mxu0 0.0
      %1761 = vmatpush1.msra.mxu0 0.0
      %1762 = vmatprep.subr.mxu0 0.0
      %1763 = vmatpush1.msra.mxu0 0.0
      %1764 = vmatprep.subr.mxu0 0.0
      %1765 = vmatpush1.msra.mxu0 0.0
      %1766 = vmatprep.subr.mxu0 0.0
      %1767 = vmatpush1.msra.mxu0 0.0
      %1768 = vmatprep.subr.mxu0 0.0
      %1769 = vmatpush1.msra.mxu0 0.0
      %1770 = vmatprep.subr.mxu0 0.0
      %1771 = vmatpush1.msra.mxu0 0.0
      %1772 = vmatprep.subr.mxu0 0.0
      %1773 = vmatpush1.msra.mxu0 0.0
      %1774 = vmatprep.subr.mxu0 0.0
      %1775 = vmatpush1.msra.mxu0 0.0
      %1776 = vmatprep.subr.mxu0 0.0
      %1777 = vmatpush1.msra.mxu0 0.0
      %1778 = vmatprep.subr.mxu0 0.0
      %1779 = vmatpush1.msra.mxu0 0.0
      %1780 = vmatprep.subr.mxu0 0.0
      %1781 = vmatpush1.msra.mxu0 0.0
      %1782 = vmatprep.subr.mxu0 0.0
      %1783 = vmatpush1.msra.mxu0 0.0
      %1784 = vmatprep.subr.mxu0 0.0
      %1785 = vmatpush1.msra.mxu0 0.0
      %1786 = vmatprep.subr.mxu0 0.0
      %1787 = vmatpush1.msra.mxu0 0.0
      %1788 = vmatprep.mubr.f32.mxu0 0.0
      %1789 = vmatmul.mubr.f32.gmra.mrb[0].mxu0 %v1722
      %v1790 = vpop.f32.mrb[0].mxu0
      %v1791 = vadd.f32 0.0, %v1790
      %v1792 = vpop.f32.mrb[0].mxu0
      %v1793 = vadd.f32 0.0, %v1792
      %1794 = vdwg.mxu0
      %v1795 = vadd.f32 %v1706, %v1791
      %v1796 = vadd.f32 %v1707, %v1793
      %s1797 = scalar_lea.vmem %s3, 48
      %v1798 = vld [vmem:[%s1797] sm:$0xff]
      %1800 = vrot.lane.b32.xlu0 %v1183, 113
      %v1801 = vpop.permute.xlu0 %1800
      %1802 = vrot.lane.b32.xlu0 %v1184, 113
      %v1803 = vpop.permute.xlu0 %1802
      %1804 = vrot.lane.b32.xlu0 %v1185, 113
      %v1805 = vpop.permute.xlu0 %1804
      %v1806 = vsel %vm899, %v1801, %v1803
      %v1807 = vsel %vm899, %v1803, %v1805
      %v1811 = vsel %vm1205, %v1798, 0
      %1813 = vmatprep.subr.mxu0 %v1807
      %1814 = vmatpush1.msra.mxu0 %v1806
      %1815 = vmatprep.subr.mxu0 0.0
      %1816 = vmatpush1.msra.mxu0 0.0
      %1817 = vmatprep.subr.mxu0 0.0
      %1818 = vmatpush1.msra.mxu0 0.0
      %1819 = vmatprep.subr.mxu0 0.0
      %1820 = vmatpush1.msra.mxu0 0.0
      %1821 = vmatprep.subr.mxu0 0.0
      %1822 = vmatpush1.msra.mxu0 0.0
      %1823 = vmatprep.subr.mxu0 0.0
      %1824 = vmatpush1.msra.mxu0 0.0
      %1825 = vmatprep.subr.mxu0 0.0
      %1826 = vmatpush1.msra.mxu0 0.0
      %1827 = vmatprep.subr.mxu0 0.0
      %1828 = vmatpush1.msra.mxu0 0.0
      %1829 = vmatprep.subr.mxu0 0.0
      %1830 = vmatpush1.msra.mxu0 0.0
      %1831 = vmatprep.subr.mxu0 0.0
      %1832 = vmatpush1.msra.mxu0 0.0
      %1833 = vmatprep.subr.mxu0 0.0
      %1834 = vmatpush1.msra.mxu0 0.0
      %1835 = vmatprep.subr.mxu0 0.0
      %1836 = vmatpush1.msra.mxu0 0.0
      %1837 = vmatprep.subr.mxu0 0.0
      %1838 = vmatpush1.msra.mxu0 0.0
      %1839 = vmatprep.subr.mxu0 0.0
      %1840 = vmatpush1.msra.mxu0 0.0
      %1841 = vmatprep.subr.mxu0 0.0
      %1842 = vmatpush1.msra.mxu0 0.0
      %1843 = vmatprep.subr.mxu0 0.0
      %1844 = vmatpush1.msra.mxu0 0.0
      %1845 = vmatprep.subr.mxu0 0.0
      %1846 = vmatpush1.msra.mxu0 0.0
      %1847 = vmatprep.subr.mxu0 0.0
      %1848 = vmatpush1.msra.mxu0 0.0
      %1849 = vmatprep.subr.mxu0 0.0
      %1850 = vmatpush1.msra.mxu0 0.0
      %1851 = vmatprep.subr.mxu0 0.0
      %1852 = vmatpush1.msra.mxu0 0.0
      %1853 = vmatprep.subr.mxu0 0.0
      %1854 = vmatpush1.msra.mxu0 0.0
      %1855 = vmatprep.subr.mxu0 0.0
      %1856 = vmatpush1.msra.mxu0 0.0
      %1857 = vmatprep.subr.mxu0 0.0
      %1858 = vmatpush1.msra.mxu0 0.0
      %1859 = vmatprep.subr.mxu0 0.0
      %1860 = vmatpush1.msra.mxu0 0.0
      %1861 = vmatprep.subr.mxu0 0.0
      %1862 = vmatpush1.msra.mxu0 0.0
      %1863 = vmatprep.subr.mxu0 0.0
      %1864 = vmatpush1.msra.mxu0 0.0
      %1865 = vmatprep.subr.mxu0 0.0
      %1866 = vmatpush1.msra.mxu0 0.0
      %1867 = vmatprep.subr.mxu0 0.0
      %1868 = vmatpush1.msra.mxu0 0.0
      %1869 = vmatprep.subr.mxu0 0.0
      %1870 = vmatpush1.msra.mxu0 0.0
      %1871 = vmatprep.subr.mxu0 0.0
      %1872 = vmatpush1.msra.mxu0 0.0
      %1873 = vmatprep.subr.mxu0 0.0
      %1874 = vmatpush1.msra.mxu0 0.0
      %1875 = vmatprep.subr.mxu0 0.0
      %1876 = vmatpush1.msra.mxu0 0.0
      %1877 = vmatprep.mubr.f32.mxu0 0.0
      %1878 = vmatmul.mubr.f32.gmra.mrb[0].mxu0 %v1811
      %v1879 = vpop.f32.mrb[0].mxu0
      %v1880 = vadd.f32 0.0, %v1879
      %v1881 = vpop.f32.mrb[0].mxu0
      %v1882 = vadd.f32 0.0, %v1881
      %1883 = vdwg.mxu0
      %v1884 = vadd.f32 %v1795, %v1880
      %v1885 = vadd.f32 %v1796, %v1882
      %s1886 = scalar_lea.vmem %s3, 56
      %v1887 = vld [vmem:[%s1886] sm:$0xff]
      %1889 = vrot.lane.b32.xlu0 %v1179, 112
      %v1890 = vpop.permute.xlu0 %1889
      %1891 = vrot.lane.b32.xlu0 %v1180, 112
      %v1892 = vpop.permute.xlu0 %1891
      %1893 = vrot.lane.b32.xlu0 %v1181, 112
      %v1894 = vpop.permute.xlu0 %1893
      %v1895 = vsel %vm990, %v1890, %v1892
      %v1896 = vsel %vm990, %v1892, %v1894
      %v1900 = vsel %vm1205, %v1887, 0
      %1902 = vmatprep.subr.mxu0 %v1896
      %1903 = vmatpush1.msra.mxu0 %v1895
      %1904 = vmatprep.subr.mxu0 0.0
      %1905 = vmatpush1.msra.mxu0 0.0
      %1906 = vmatprep.subr.mxu0 0.0
      %1907 = vmatpush1.msra.mxu0 0.0
      %1908 = vmatprep.subr.mxu0 0.0
      %1909 = vmatpush1.msra.mxu0 0.0
      %1910 = vmatprep.subr.mxu0 0.0
      %1911 = vmatpush1.msra.mxu0 0.0
      %1912 = vmatprep.subr.mxu0 0.0
      %1913 = vmatpush1.msra.mxu0 0.0
      %1914 = vmatprep.subr.mxu0 0.0
      %1915 = vmatpush1.msra.mxu0 0.0
      %1916 = vmatprep.subr.mxu0 0.0
      %1917 = vmatpush1.msra.mxu0 0.0
      %1918 = vmatprep.subr.mxu0 0.0
      %1919 = vmatpush1.msra.mxu0 0.0
      %1920 = vmatprep.subr.mxu0 0.0
      %1921 = vmatpush1.msra.mxu0 0.0
      %1922 = vmatprep.subr.mxu0 0.0
      %1923 = vmatpush1.msra.mxu0 0.0
      %1924 = vmatprep.subr.mxu0 0.0
      %1925 = vmatpush1.msra.mxu0 0.0
      %1926 = vmatprep.subr.mxu0 0.0
      %1927 = vmatpush1.msra.mxu0 0.0
      %1928 = vmatprep.subr.mxu0 0.0
      %1929 = vmatpush1.msra.mxu0 0.0
      %1930 = vmatprep.subr.mxu0 0.0
      %1931 = vmatpush1.msra.mxu0 0.0
      %1932 = vmatprep.subr.mxu0 0.0
      %1933 = vmatpush1.msra.mxu0 0.0
      %1934 = vmatprep.subr.mxu0 0.0
      %1935 = vmatpush1.msra.mxu0 0.0
      %1936 = vmatprep.subr.mxu0 0.0
      %1937 = vmatpush1.msra.mxu0 0.0
      %1938 = vmatprep.subr.mxu0 0.0
      %1939 = vmatpush1.msra.mxu0 0.0
      %1940 = vmatprep.subr.mxu0 0.0
      %1941 = vmatpush1.msra.mxu0 0.0
      %1942 = vmatprep.subr.mxu0 0.0
      %1943 = vmatpush1.msra.mxu0 0.0
      %1944 = vmatprep.subr.mxu0 0.0
      %1945 = vmatpush1.msra.mxu0 0.0
      %1946 = vmatprep.subr.mxu0 0.0
      %1947 = vmatpush1.msra.mxu0 0.0
      %1948 = vmatprep.subr.mxu0 0.0
      %1949 = vmatpush1.msra.mxu0 0.0
      %1950 = vmatprep.subr.mxu0 0.0
      %1951 = vmatpush1.msra.mxu0 0.0
      %1952 = vmatprep.subr.mxu0 0.0
      %1953 = vmatpush1.msra.mxu0 0.0
      %1954 = vmatprep.subr.mxu0 0.0
      %1955 = vmatpush1.msra.mxu0 0.0
      %1956 = vmatprep.subr.mxu0 0.0
      %1957 = vmatpush1.msra.mxu0 0.0
      %1958 = vmatprep.subr.mxu0 0.0
      %1959 = vmatpush1.msra.mxu0 0.0
      %1960 = vmatprep.subr.mxu0 0.0
      %1961 = vmatpush1.msra.mxu0 0.0
      %1962 = vmatprep.subr.mxu0 0.0
      %1963 = vmatpush1.msra.mxu0 0.0
      %1964 = vmatprep.subr.mxu0 0.0
      %1965 = vmatpush1.msra.mxu0 0.0
      %1966 = vmatprep.mubr.f32.mxu0 0.0
      %1967 = vmatmul.mubr.f32.gmra.mrb[0].mxu0 %v1900
      %v1968 = vpop.f32.mrb[0].mxu0
      %v1969 = vadd.f32 0.0, %v1968
      %v1970 = vpop.f32.mrb[0].mxu0
      %v1971 = vadd.f32 0.0, %v1970
      %1972 = vdwg.mxu0
      %v1973 = vadd.f32 %v1884, %v1969
      %v1974 = vadd.f32 %v1885, %v1971
      %s1975 = scalar_lea.vmem %s3, 64
      %v1976 = vld [vmem:[%s1975] sm:$0xff]
      %1977 = vrot.lane.b32.xlu0 %v1187, 111
      %v1978 = vpop.permute.xlu0 %1977
      %1979 = vrot.lane.b32.xlu0 %v1188, 111
      %v1980 = vpop.permute.xlu0 %1979
      %1981 = vrot.lane.b32.xlu0 %v1189, 111
      %v1982 = vpop.permute.xlu0 %1981
      %v1983 = vsel %vm1081, %v1978, %v1980
      %v1984 = vsel %vm1081, %v1980, %v1982
      %v1988 = vsel %vm1205, %v1976, 0
      %1990 = vmatprep.subr.mxu0 %v1984
      %1991 = vmatpush1.msra.mxu0 %v1983
      %1992 = vmatprep.subr.mxu0 0.0
      %1993 = vmatpush1.msra.mxu0 0.0
      %1994 = vmatprep.subr.mxu0 0.0
      %1995 = vmatpush1.msra.mxu0 0.0
      %1996 = vmatprep.subr.mxu0 0.0
      %1997 = vmatpush1.msra.mxu0 0.0
      %1998 = vmatprep.subr.mxu0 0.0
      %1999 = vmatpush1.msra.mxu0 0.0
      %2000 = vmatprep.subr.mxu0 0.0
      %2001 = vmatpush1.msra.mxu0 0.0
      %2002 = vmatprep.subr.mxu0 0.0
      %2003 = vmatpush1.msra.mxu0 0.0
      %2004 = vmatprep.subr.mxu0 0.0
      %2005 = vmatpush1.msra.mxu0 0.0
      %2006 = vmatprep.subr.mxu0 0.0
      %2007 = vmatpush1.msra.mxu0 0.0
      %2008 = vmatprep.subr.mxu0 0.0
      %2009 = vmatpush1.msra.mxu0 0.0
      %2010 = vmatprep.subr.mxu0 0.0
      %2011 = vmatpush1.msra.mxu0 0.0
      %2012 = vmatprep.subr.mxu0 0.0
      %2013 = vmatpush1.msra.mxu0 0.0
      %2014 = vmatprep.subr.mxu0 0.0
      %2015 = vmatpush1.msra.mxu0 0.0
      %2016 = vmatprep.subr.mxu0 0.0
      %2017 = vmatpush1.msra.mxu0 0.0
      %2018 = vmatprep.subr.mxu0 0.0
      %2019 = vmatpush1.msra.mxu0 0.0
      %2020 = vmatprep.subr.mxu0 0.0
      %2021 = vmatpush1.msra.mxu0 0.0
      %2022 = vmatprep.subr.mxu0 0.0
      %2023 = vmatpush1.msra.mxu0 0.0
      %2024 = vmatprep.subr.mxu0 0.0
      %2025 = vmatpush1.msra.mxu0 0.0
      %2026 = vmatprep.subr.mxu0 0.0
      %2027 = vmatpush1.msra.mxu0 0.0
      %2028 = vmatprep.subr.mxu0 0.0
      %2029 = vmatpush1.msra.mxu0 0.0
      %2030 = vmatprep.subr.mxu0 0.0
      %2031 = vmatpush1.msra.mxu0 0.0
      %2032 = vmatprep.subr.mxu0 0.0
      %2033 = vmatpush1.msra.mxu0 0.0
      %2034 = vmatprep.subr.mxu0 0.0
      %2035 = vmatpush1.msra.mxu0 0.0
      %2036 = vmatprep.subr.mxu0 0.0
      %2037 = vmatpush1.msra.mxu0 0.0
      %2038 = vmatprep.subr.mxu0 0.0
      %2039 = vmatpush1.msra.mxu0 0.0
      %2040 = vmatprep.subr.mxu0 0.0
      %2041 = vmatpush1.msra.mxu0 0.0
      %2042 = vmatprep.subr.mxu0 0.0
      %2043 = vmatpush1.msra.mxu0 0.0
      %2044 = vmatprep.subr.mxu0 0.0
      %2045 = vmatpush1.msra.mxu0 0.0
      %2046 = vmatprep.subr.mxu0 0.0
      %2047 = vmatpush1.msra.mxu0 0.0
      %2048 = vmatprep.subr.mxu0 0.0
      %2049 = vmatpush1.msra.mxu0 0.0
      %2050 = vmatprep.subr.mxu0 0.0
      %2051 = vmatpush1.msra.mxu0 0.0
      %2052 = vmatprep.subr.mxu0 0.0
      %2053 = vmatpush1.msra.mxu0 0.0
      %2054 = vmatprep.mubr.f32.mxu0 0.0
      %2055 = vmatmul.mubr.f32.gmra.mrb[0].mxu0 %v1988
      %v2056 = vpop.f32.mrb[0].mxu0
      %v2057 = vadd.f32 0.0, %v2056
      %v2058 = vpop.f32.mrb[0].mxu0
      %v2059 = vadd.f32 0.0, %v2058
      %2060 = vdwg.mxu0
      %v2061 = vadd.f32 %v1973, %v2057
      %v2062 = vadd.f32 %v1974, %v2059
      %v2063 = vld [vmem:[%s5] sm:$0xff]
      %2065 = vset.pattern.permute.xlu0 0
      %2066 = vperm.xlu0 %2065, %v2063
      %v2067 = vpop.permute.xlu0 %2066
      %v2069 = vadd.f32 %v2061, %v2067
      %v2070 = vadd.f32 %v2062, %v2067
      %v2071 = vmax.f32 %v2069, 0.0
      %v2072 = vmax.f32 %v2070, 0.0
      %2073 = vst [vmem:[%s251] sm:$0xff] %v2071
      %2074 = vst [vmem:[%s251 + $0x8] sm:$0xff] %v2072
      %p2075 = scmp.lt.s32.totalorder %s17, 1
      %s2076 = scalar_select %p2075, %s17, 1
      %s2077 = smul.addr %s2076, 2
      %s2078 = smul.addr %s2077, 8
      %s2079 = scalar_lea.vmem %s6, %s2078
      // Predicated region
      $region45: #{double_conv_forward.1} parent=43 // pred_check
        %p2080 = pneg %p166
      $region46: #{double_conv_forward.1} parent=43 // pred_check_branch
        %2082 = sbr.rel (%p2080) target = $region48
      $region47: #{double_conv_forward.1} parent=43 // pred_region
        _
      $region48: #{double_conv_forward.1} parent=43 // pred_fallthru
        _
    $region44: #{double_conv_forward.1} parent=5 // pred_fallthru
      _
    %p2083 = scmp.le.s32.totalorder 2, %s12
    // Predicated region
    $region49: #{double_conv_forward.1} parent=5 // pred_check
      %p2084 = pneg %p2083
    $region50: #{double_conv_forward.1} parent=5 // pred_check_branch
      %2086 = sbr.rel (%p2084) target = $region52
    $region51: #{double_conv_forward.1} parent=5 // pred_region
      %s2087 = ssub.s32 %s12, 2
      // Predicated region
      $region53: #{double_conv_forward.1} parent=51 // pred_check
        %p2088 = pneg %p172
      $region54: #{double_conv_forward.1} parent=51 // pred_check_branch
        %2090 = sbr.rel (%p2088) target = $region56
      $region55: #{double_conv_forward.1} parent=51 // pred_region
        %p2091 = scmp.lt.s32.totalorder %s18, 1
        %s2092 = scalar_select %p2091, %s18, 1
        %s2093 = smul.addr %s2092, 2
        %s2094 = smul.addr %s2093, 8
        %s2095 = scalar_lea.vmem %s6, %s2094
      $region56: #{double_conv_forward.1} parent=51 // pred_fallthru
        _
    $region52: #{double_conv_forward.1} parent=5 // pred_fallthru
      _
  $region6: #{double_conv_forward.1} parent=0 // loop_footer
    %s16 = sadd.s32 1, %s12
  $region7: #{double_conv_forward.1} parent=0 // loop_footer_branch
    %11 = sbr.rel target = $region3
  $region8: #{double_conv_forward.1} parent=0 // loop_exit
    _

</llo_original>
